<compile_context>
chip_gen: v5e
topology: v5e:2x2
jax: 0.10.0
libtpu: 0.0.40
codegen_flags: <defaults>
</compile_context>

<pallas_src>
import jax
import jax.numpy as jnp
from jax.experimental import pallas as pl
from jax.experimental.pallas import tpu as pltpu


def _decoder_kernel(z_ref, w1_ref, b1_ref, w2_ref, b2_ref, out_ref):
    # Layer 1: MXU matmul (bf16 pass when params are bf16) with f32 accumulation;
    # bias + ReLU in f32 on the VPU (required on v5e: no bf16 VPU/EUP).
    h = jnp.dot(z_ref[...], w1_ref[...], preferred_element_type=jnp.float32)
    h = jnp.maximum(h + b1_ref[...].astype(jnp.float32), 0.0)
    # Layer 2: cast h back to the weight dtype so the MXU pass stays bf16 when
    # params are bf16 (no-op for f32 params); accumulate in f32.
    o = jnp.dot(h.astype(w2_ref.dtype), w2_ref[...],
                preferred_element_type=jnp.float32)
    x = o + b2_ref[...].astype(jnp.float32)
    if jnp.dtype(out_ref.dtype) == jnp.dtype(jnp.float32):
        # Exact-precision path (used by the f32 correctness check).
        y = jax.nn.sigmoid(x)
    else:
        # EUP-friendly sigmoid for the bf16 path: exp + approx reciprocal both
        # live in the EUP slot; ample precision for a bf16 store.  Clamp keeps
        # exp finite for saturated inputs.
        x = jnp.clip(x, -30.0, 30.0)
        y = pl.reciprocal(1.0 + jnp.exp(-x), approx=True)
    out_ref[...] = y.astype(out_ref.dtype)


def detect_mxu_k(default=128):
    """MXU contraction width for the local TPU generation (128 on v4/v5e/v5p,
    256 on v6e/v7x).  Falls back to 128 if detection fails."""
    try:
        kind = jax.devices()[0].device_kind.lower()
    except Exception:
        return default
    if any(tag in kind for tag in ("v6", "v7", "7x")):
        return 256
    return default


def choose_pack(z_dim, out_dim, *, mxu_k=128, max_pack=16):
    """Largest power-of-two pack such that the packed output lane width is a
    multiple of 128 (unmasked vst) and pack*z_dim does not exceed the MXU K
    width (no wasted K fill).  Falls back to 1."""
    best, p = 1, 2
    while p <= max_pack:
        if p * z_dim <= mxu_k and (p * out_dim) % 128 == 0:
            best = p
        p *= 2
    return best


def prepare_decoder_params(w1, b1, w2, b2, *, pack=1, param_dtype=jnp.bfloat16):
    """One-time parameter prep (hoist out of the per-call path / jit constant):
      - transpose nn.Linear weights (out, in) -> (in, out)
      - optionally cast to bf16 (recommended: halves weight VMEM, bf16 MXU)
      - replicate block-diagonally `pack` times so `pack` consecutive batch
        rows are processed as one packed row (lane-dense I/O, good MXU fill).
    """
    w1_t = jnp.transpose(w1)                    # (z_dim, h_dim)
    w2_t = jnp.transpose(w2)                    # (h_dim, out_dim)
    if param_dtype is not None:
        w1_t = w1_t.astype(param_dtype)
        w2_t = w2_t.astype(param_dtype)
        b1 = b1.astype(param_dtype)
        b2 = b2.astype(param_dtype)
    if pack > 1:
        eye = jnp.eye(pack, dtype=w1_t.dtype)
        w1_t = jnp.kron(eye, w1_t)              # (pack*z_dim, pack*h_dim)
        w2_t = jnp.kron(eye, w2_t)              # (pack*h_dim, pack*out_dim)
        b1 = jnp.tile(b1, pack)
        b2 = jnp.tile(b2, pack)
    return w1_t, b1.reshape(1, -1), w2_t, b2.reshape(1, -1)


# Lazily probed: does this jax build accept pl.Buffered(1) on a BlockSpec?
_SINGLE_BUFFER_CONSTS_OK = None


def decoder_forward(z, params, *, pack, tile_b=16384, out_dtype=None,
                    vmem_limit_bytes=None):
    """z: (B, z_dim) float.  params: output of prepare_decoder_params(pack=pack)."""
    global _SINGLE_BUFFER_CONSTS_OK

    w1_bd, b1_2d, w2_bd, b2_2d = params
    B, z_dim = z.shape
    pz, ph = w1_bd.shape                         # pack*z_dim, pack*h_dim
    po = w2_bd.shape[1]                          # pack*out_dim
    assert pz == pack * z_dim, "params were prepared with a different pack factor"
    h_dim = ph // pack
    out_dim = po // pack

    io_dtype = w1_bd.dtype                       # bf16 (recommended) or f32
    out_dtype = io_dtype if out_dtype is None else jnp.dtype(out_dtype)
    if z.dtype != io_dtype:
        z = z.astype(io_dtype)                   # halves the z HBM traffic for bf16

    io_b = jnp.dtype(io_dtype).itemsize
    out_b = jnp.dtype(out_dtype).itemsize

    # --- batch tiling --------------------------------------------------------
    # Packed-sublane quantization: 16 for 2-byte I/O (native (16,128) tiling,
    # unmasked stores), 8 for f32.
    sub = 16 if min(io_b, out_b) == 2 else 8
    quant = sub * pack
    tile_b = max(quant, (int(tile_b) // quant) * quant)
    # Clamp so that grid_b >= 2 whenever B > quant (keeps the second v7x
    # TensorCore busy) and padding never exceeds one tile.
    half = pl.cdiv(pl.cdiv(B, 2), quant) * quant
    tile_b = min(tile_b, max(quant, half))
    grid_b = pl.cdiv(B, tile_b)
    B_pad = grid_b * tile_b
    if B_pad != B:
        z = jnp.pad(z, ((0, B_pad - B), (0, 0)))

    # Pure row-major reinterpretation: fold `pack` consecutive rows into lanes.
    z_packed = z.reshape(B_pad // pack, pz)
    tr = tile_b // pack                          # packed rows per grid step

    # --- VMEM budget (v7x only has 64 MiB physical) --------------------------
    if vmem_limit_bytes is None:
        need = (2 * tr * pz * io_b                # double-buffered z tiles
                + 2 * tr * po * out_b             # double-buffered out tiles
                + (pz * ph + ph + ph * po + po) * io_b   # resident params
                + tr * (ph + po) * 4)             # f32 h / o temporaries
        vmem_limit_bytes = min(max(2 * need, 32 * 1024 * 1024), 48 * 1024 * 1024)

    # --- cost estimate: useful FLOPs (not the pack-inflated block-diag count) -
    flops = 2 * B_pad * (z_dim * h_dim + h_dim * out_dim) \
            + 3 * B_pad * (h_dim + out_dim)
    bytes_accessed = (B_pad * z_dim * io_b
                      + B_pad * out_dim * out_b
                      + (pz * ph + ph + ph * po + po) * io_b)
    cost = pl.CostEstimate(flops=int(flops),
                           transcendentals=int(B_pad * out_dim),
                           bytes_accessed=int(bytes_accessed))

    def run(buffer_consts):
        # Constant-index operands never re-DMA; single-buffer them to save VMEM.
        kw = {"pipeline_mode": pl.Buffered(1)} if buffer_consts else {}
        return pl.pallas_call(
            _decoder_kernel,
            out_shape=jax.ShapeDtypeStruct((B_pad // pack, po), out_dtype),
            grid_spec=pltpu.PrefetchScalarGridSpec(
                num_scalar_prefetch=0,
                grid=(grid_b,),
                in_specs=[
                    pl.BlockSpec((tr, pz), lambda i: (i, 0)),          # packed z tile
                    pl.BlockSpec((pz, ph), lambda i: (0, 0), **kw),    # block-diag W1^T
                    pl.BlockSpec((1, ph), lambda i: (0, 0), **kw),     # tiled b1
                    pl.BlockSpec((ph, po), lambda i: (0, 0), **kw),    # block-diag W2^T
                    pl.BlockSpec((1, po), lambda i: (0, 0), **kw),     # tiled b2
                ],
                # Lane-dense (multiple-of-128) packed output -> unmasked vst.
                # TODO(synk): on v5e (single vst slot) check the bundle dump if
                # the store slot saturates at very large po.
                out_specs=pl.BlockSpec((tr, po), lambda i: (i, 0)),
            ),
            compiler_params=pltpu.CompilerParams(
                dimension_semantics=("parallel",),       # megacore-shardable (v7x)
                vmem_limit_bytes=int(vmem_limit_bytes),
            ),
            cost_estimate=cost,
        )(z_packed, w1_bd, b1_2d, w2_bd, b2_2d)

    want_single = _SINGLE_BUFFER_CONSTS_OK is not False
    try:
        out_packed = run(buffer_consts=want_single)
        if _SINGLE_BUFFER_CONSTS_OK is None:
            _SINGLE_BUFFER_CONSTS_OK = want_single
    except Exception:
        if not want_single:
            raise
        _SINGLE_BUFFER_CONSTS_OK = False          # this jax build rejects Buffered(1)
        out_packed = run(buffer_consts=False)

    out = out_packed.reshape(B_pad, out_dim)     # row-major unpack (free)
    return out[:B] if B_pad != B else out


def _reference(z, w1, b1, w2, b2):
    h = jnp.maximum(z @ w1.T + b1, 0.0)
    return jax.nn.sigmoid(h @ w2.T + b2)


if __name__ == "__main__":
    # Shapes consistent with the module's forward: z_dim=16, h_dim=32, output_dim=64
    B, z_dim, h_dim, output_dim = 8, 16, 32, 64

    key = jax.random.PRNGKey(0)
    k_z, k_w1, k_b1, k_w2, k_b2 = jax.random.split(key, 5)

    z = jax.random.normal(k_z, (B, z_dim), dtype=jnp.float32)
    # Deterministic synthetic parameters (PyTorch nn.Linear layout: (out, in)).
    w1 = jax.random.normal(k_w1, (h_dim, z_dim), dtype=jnp.float32) * 0.1
    b1 = jax.random.normal(k_b1, (h_dim,), dtype=jnp.float32) * 0.1
    w2 = jax.random.normal(k_w2, (output_dim, h_dim), dtype=jnp.float32) * 0.1
    b2 = jax.random.normal(k_b2, (output_dim,), dtype=jnp.float32) * 0.1

    mxu_k = detect_mxu_k()                                # 128 (v5e) / 256 (v6e,v7x)
    pack = choose_pack(z_dim, output_dim, mxu_k=mxu_k)    # 8 or 16 for these dims
    ref = _reference(z, w1, b1, w2, b2)

    # 1) Exact-precision path (f32 params / f32 I/O): tight correctness check.
    params_f32 = prepare_decoder_params(w1, b1, w2, b2, pack=pack,
                                        param_dtype=jnp.float32)
    out_f32 = jax.block_until_ready(decoder_forward(z, params_f32, pack=pack,
                                                    out_dtype=jnp.float32))
    assert out_f32.shape == (B, output_dim)
    assert jnp.allclose(out_f32, ref, atol=1e-5, rtol=1e-5)

    # 2) Recommended bf16-I/O path (halves HBM traffic; bf16 MXU passes).
    params_bf16 = prepare_decoder_params(w1, b1, w2, b2, pack=pack)   # bf16 default
    out_bf16 = jax.block_until_ready(decoder_forward(z, params_bf16, pack=pack))
    assert out_bf16.shape == (B, output_dim)
    assert out_bf16.dtype == jnp.bfloat16
    assert jnp.allclose(out_bf16.astype(jnp.float32), ref, atol=2e-2, rtol=2e-2)

    # 3) Ragged, multi-tile batch: exercises padding + >=2 parallel grid steps.
    B2 = 1000
    z2 = jax.random.normal(jax.random.PRNGKey(1), (B2, z_dim), dtype=jnp.float32)
    out2 = jax.block_until_ready(decoder_forward(z2, params_bf16, pack=pack))
    ref2 = _reference(z2, w1, b1, w2, b2)
    assert out2.shape == (B2, output_dim)
    assert jnp.allclose(out2.astype(jnp.float32), ref2, atol=2e-2, rtol=2e-2)

    print("KERNEL_OK")
</pallas_src>

<mosaic_0001>
module attributes {stable_mosaic.version = 11 : i64} {
  func.func @_decoder_kernel(%arg0: i32, %arg1: memref<8x128xf32, #tpu.memory_space<vmem>>, %arg2: memref<128x256xf32, #tpu.memory_space<vmem>>, %arg3: memref<1x256xf32, #tpu.memory_space<vmem>>, %arg4: memref<256x512xf32, #tpu.memory_space<vmem>>, %arg5: memref<1x512xf32, #tpu.memory_space<vmem>>, %arg6: memref<8x512xf32, #tpu.memory_space<vmem>>) attributes {dimension_semantics = [#tpu.dimension_semantics<parallel>], iteration_bounds = array<i64: 1>, scalar_prefetch = 0 : i64, scratch_operands = 0 : i64, tpu.core_type = #tpu.core_type<tc>, window_params = [{transform_indices = @transform_0, window_bounds = array<i64: 8, 128>}, {pipeline_mode = #tpu.pipeline_mode<synchronous>, transform_indices = @transform_1, window_bounds = array<i64: 128, 256>}, {pipeline_mode = #tpu.pipeline_mode<synchronous>, transform_indices = @transform_2, window_bounds = array<i64: 1, 256>}, {pipeline_mode = #tpu.pipeline_mode<synchronous>, transform_indices = @transform_3, window_bounds = array<i64: 256, 512>}, {pipeline_mode = #tpu.pipeline_mode<synchronous>, transform_indices = @transform_4, window_bounds = array<i64: 1, 512>}, {transform_indices = @transform_5, window_bounds = array<i64: 8, 512>}]} {
    %c0 = arith.constant 0 : index
    %c0_0 = arith.constant 0 : index
    %0 = vector.load %arg1[%c0, %c0_0] : memref<8x128xf32, #tpu.memory_space<vmem>>, vector<8x128xf32>
    %c0_1 = arith.constant 0 : index
    %c0_2 = arith.constant 0 : index
    %1 = vector.load %arg2[%c0_1, %c0_2] : memref<128x256xf32, #tpu.memory_space<vmem>>, vector<128x256xf32>
    %cst = arith.constant dense<0.000000e+00> : vector<8x256xf32>
    %2 = tpu.matmul %0, %1, %cst {dimension_numbers = #tpu.dot_dimension_numbers<[1], [0], [0], [1], [0, 0, 1, 1], [], []>} : vector<8x128xf32>, vector<128x256xf32>, vector<8x256xf32> -> vector<8x256xf32>
    %c0_3 = arith.constant 0 : index
    %c0_4 = arith.constant 0 : index
    %3 = vector.load %arg3[%c0_3, %c0_4] : memref<1x256xf32, #tpu.memory_space<vmem>>, vector<1x256xf32>
    %4 = vector.broadcast %3 : vector<1x256xf32> to vector<8x256xf32>
    %5 = arith.addf %2, %4 : vector<8x256xf32>
    %cst_5 = arith.constant 0.000000e+00 : f32
    %6 = vector.broadcast %cst_5 : f32 to vector<8x256xf32>
    %7 = arith.maximumf %5, %6 : vector<8x256xf32>
    %c0_6 = arith.constant 0 : index
    %c0_7 = arith.constant 0 : index
    %8 = vector.load %arg4[%c0_6, %c0_7] : memref<256x512xf32, #tpu.memory_space<vmem>>, vector<256x512xf32>
    %cst_8 = arith.constant dense<0.000000e+00> : vector<8x512xf32>
    %9 = tpu.matmul %7, %8, %cst_8 {dimension_numbers = #tpu.dot_dimension_numbers<[1], [0], [0], [1], [0, 0, 1, 1], [], []>} : vector<8x256xf32>, vector<256x512xf32>, vector<8x512xf32> -> vector<8x512xf32>
    %c0_9 = arith.constant 0 : index
    %c0_10 = arith.constant 0 : index
    %10 = vector.load %arg5[%c0_9, %c0_10] : memref<1x512xf32, #tpu.memory_space<vmem>>, vector<1x512xf32>
    %11 = vector.broadcast %10 : vector<1x512xf32> to vector<8x512xf32>
    %12 = arith.addf %9, %11 : vector<8x512xf32>
    %13 = arith.negf %12 : vector<8x512xf32>
    %14 = math.exp %13 : vector<8x512xf32>
    %cst_11 = arith.constant 1.000000e+00 : f32
    %15 = vector.broadcast %cst_11 : f32 to vector<8x512xf32>
    %16 = arith.addf %15, %14 : vector<8x512xf32>
    %17 = arith.divf %15, %16 : vector<8x512xf32>
    %c0_12 = arith.constant 0 : index
    %c0_13 = arith.constant 0 : index
    %18 = vector.load %arg6[%c0_12, %c0_13] : memref<8x512xf32, #tpu.memory_space<vmem>>, vector<8x512xf32>
    tpu.vector_store %arg6[%c0_12, %c0_13], %17 {strides = array<i32>} : memref<8x512xf32, #tpu.memory_space<vmem>>, vector<8x512xf32>,
    return
  }
  func.func @transform_0(%arg0: i32) -> (i32, i32) {
    %c0_i32 = arith.constant 0 : i32
    %c0_i32_0 = arith.constant 0 : i32
    return %arg0, %c0_i32 : i32, i32
  }
  func.func @transform_1(%arg0: i32) -> (i32, i32) {
    %c0_i32 = arith.constant 0 : i32
    %c0_i32_0 = arith.constant 0 : i32
    %c0_i32_1 = arith.constant 0 : i32
    return %c0_i32, %c0_i32_0 : i32, i32
  }
  func.func @transform_2(%arg0: i32) -> (i32, i32) {
    %c0_i32 = arith.constant 0 : i32
    %c0_i32_0 = arith.constant 0 : i32
    %c0_i32_1 = arith.constant 0 : i32
    return %c0_i32, %c0_i32_0 : i32, i32
  }
  func.func @transform_3(%arg0: i32) -> (i32, i32) {
    %c0_i32 = arith.constant 0 : i32
    %c0_i32_0 = arith.constant 0 : i32
    %c0_i32_1 = arith.constant 0 : i32
    return %c0_i32, %c0_i32_0 : i32, i32
  }
  func.func @transform_4(%arg0: i32) -> (i32, i32) {
    %c0_i32 = arith.constant 0 : i32
    %c0_i32_0 = arith.constant 0 : i32
    %c0_i32_1 = arith.constant 0 : i32
    return %c0_i32, %c0_i32_0 : i32, i32
  }
  func.func @transform_5(%arg0: i32) -> (i32, i32) {
    %c0_i32 = arith.constant 0 : i32
    %c0_i32_0 = arith.constant 0 : i32
    return %arg0, %c0_i32 : i32, i32
  }
}

module attributes {stable_mosaic.version = 11 : i64} {
  func.func @_decoder_kernel(%arg0: i32, %arg1: memref<8x128xf32, #tpu.memory_space<vmem>>, %arg2: memref<128x256xf32, #tpu.memory_space<vmem>>, %arg3: memref<1x256xf32, #tpu.memory_space<vmem>>, %arg4: memref<256x512xf32, #tpu.memory_space<vmem>>, %arg5: memref<1x512xf32, #tpu.memory_space<vmem>>, %arg6: memref<8x512xf32, #tpu.memory_space<vmem>>) attributes {dimension_semantics = [#tpu.dimension_semantics<parallel>], iteration_bounds = array<i64: 1>, scalar_prefetch = 0 : i64, scratch_operands = 0 : i64, tpu.core_type = #tpu.core_type<tc>, window_params = [{transform_indices = @transform_0, window_bounds = array<i64: 8, 128>}, {pipeline_mode = #tpu.pipeline_mode<synchronous>, transform_indices = @transform_1, window_bounds = array<i64: 128, 256>}, {pipeline_mode = #tpu.pipeline_mode<synchronous>, transform_indices = @transform_2, window_bounds = array<i64: 1, 256>}, {pipeline_mode = #tpu.pipeline_mode<synchronous>, transform_indices = @transform_3, window_bounds = array<i64: 256, 512>}, {pipeline_mode = #tpu.pipeline_mode<synchronous>, transform_indices = @transform_4, window_bounds = array<i64: 1, 512>}, {transform_indices = @transform_5, window_bounds = array<i64: 8, 512>}]} {
    %c0 = arith.constant 0 : index
    %c0_0 = arith.constant 0 : index
    %0 = vector.load %arg1[%c0, %c0_0] : memref<8x128xf32, #tpu.memory_space<vmem>>, vector<8x128xf32>
    %c0_1 = arith.constant 0 : index
    %c0_2 = arith.constant 0 : index
    %1 = vector.load %arg2[%c0_1, %c0_2] : memref<128x256xf32, #tpu.memory_space<vmem>>, vector<128x256xf32>
    %cst = arith.constant dense<0.000000e+00> : vector<8x256xf32>
    %2 = tpu.matmul %0, %1, %cst {dimension_numbers = #tpu.dot_dimension_numbers<[1], [0], [0], [1], [0, 0, 1, 1], [], []>} : vector<8x128xf32>, vector<128x256xf32>, vector<8x256xf32> -> vector<8x256xf32>
    %c0_3 = arith.constant 0 : index
    %c0_4 = arith.constant 0 : index
    %3 = vector.load %arg3[%c0_3, %c0_4] : memref<1x256xf32, #tpu.memory_space<vmem>>, vector<1x256xf32>
    %4 = vector.broadcast %3 : vector<1x256xf32> to vector<8x256xf32>
    %5 = arith.addf %2, %4 : vector<8x256xf32>
    %cst_5 = arith.constant 0.000000e+00 : f32
    %6 = vector.broadcast %cst_5 : f32 to vector<8x256xf32>
    %7 = arith.maximumf %5, %6 : vector<8x256xf32>
    %c0_6 = arith.constant 0 : index
    %c0_7 = arith.constant 0 : index
    %8 = vector.load %arg4[%c0_6, %c0_7] : memref<256x512xf32, #tpu.memory_space<vmem>>, vector<256x512xf32>
    %cst_8 = arith.constant dense<0.000000e+00> : vector<8x512xf32>
    %9 = tpu.matmul %7, %8, %cst_8 {dimension_numbers = #tpu.dot_dimension_numbers<[1], [0], [0], [1], [0, 0, 1, 1], [], []>} : vector<8x256xf32>, vector<256x512xf32>, vector<8x512xf32> -> vector<8x512xf32>
    %c0_9 = arith.constant 0 : index
    %c0_10 = arith.constant 0 : index
    %10 = vector.load %arg5[%c0_9, %c0_10] : memref<1x512xf32, #tpu.memory_space<vmem>>, vector<1x512xf32>
    %11 = vector.broadcast %10 : vector<1x512xf32> to vector<8x512xf32>
    %12 = arith.addf %9, %11 : vector<8x512xf32>
    %13 = arith.negf %12 : vector<8x512xf32>
    %14 = math.exp %13 : vector<8x512xf32>
    %cst_11 = arith.constant 1.000000e+00 : f32
    %15 = vector.broadcast %cst_11 : f32 to vector<8x512xf32>
    %16 = arith.addf %15, %14 : vector<8x512xf32>
    %17 = arith.divf %15, %16 : vector<8x512xf32>
    %c0_12 = arith.constant 0 : index
    %c0_13 = arith.constant 0 : index
    %18 = vector.load %arg6[%c0_12, %c0_13] : memref<8x512xf32, #tpu.memory_space<vmem>>, vector<8x512xf32>
    tpu.vector_store %arg6[%c0_12, %c0_13], %17 {strides = array<i32>} : memref<8x512xf32, #tpu.memory_space<vmem>>, vector<8x512xf32>,
    return
  }
  func.func @transform_0(%arg0: i32) -> (i32, i32) {
    %c0_i32 = arith.constant 0 : i32
    %c0_i32_0 = arith.constant 0 : i32
    return %arg0, %c0_i32 : i32, i32
  }
  func.func @transform_1(%arg0: i32) -> (i32, i32) {
    %c0_i32 = arith.constant 0 : i32
    %c0_i32_0 = arith.constant 0 : i32
    %c0_i32_1 = arith.constant 0 : i32
    return %c0_i32, %c0_i32_0 : i32, i32
  }
  func.func @transform_2(%arg0: i32) -> (i32, i32) {
    %c0_i32 = arith.constant 0 : i32
    %c0_i32_0 = arith.constant 0 : i32
    %c0_i32_1 = arith.constant 0 : i32
    return %c0_i32, %c0_i32_0 : i32, i32
  }
  func.func @transform_3(%arg0: i32) -> (i32, i32) {
    %c0_i32 = arith.constant 0 : i32
    %c0_i32_0 = arith.constant 0 : i32
    %c0_i32_1 = arith.constant 0 : i32
    return %c0_i32, %c0_i32_0 : i32, i32
  }
  func.func @transform_4(%arg0: i32) -> (i32, i32) {
    %c0_i32 = arith.constant 0 : i32
    %c0_i32_0 = arith.constant 0 : i32
    %c0_i32_1 = arith.constant 0 : i32
    return %c0_i32, %c0_i32_0 : i32, i32
  }
  func.func @transform_5(%arg0: i32) -> (i32, i32) {
    %c0_i32 = arith.constant 0 : i32
    %c0_i32_0 = arith.constant 0 : i32
    return %arg0, %c0_i32 : i32, i32
  }
}

</mosaic_0001>

<llo_original>
// kernel: tpu_custom_call.1
$region0: #{tpu_custom_call.1}
  #allocation0 [shape = 'u32[]', space=smem, size = 0x4, offset = 0x4, fixed_abs, tag = 'smem constant byte address 0x4 - core index']
  #allocation1 [shape = 'u32[72,128]{1,0:T(1,128)}', space=vmem, size = 0x9000, scoped, tag = 'internal scratch']
  %s0 = inlined_call_operand.hbm [shape: f32[8,128], index: 0, kind: input, shape index: {}]
  %s1 = inlined_call_operand.hbm [shape: f32[128,256], index: 1, kind: input, shape index: {}]
  %s2 = inlined_call_operand.hbm [shape: f32[1,256], index: 2, kind: input, shape index: {}]
  %s3 = inlined_call_operand.hbm [shape: f32[256,512], index: 3, kind: input, shape index: {}]
  %s4 = inlined_call_operand.hbm [shape: f32[1,512], index: 4, kind: input, shape index: {}]
  %s5 = inlined_call_operand.hbm [shape: f32[8,512], index: 5, kind: output, shape index: {}]
  %s6 = sld [smem:[#allocation0]]
  $region50: #{tpu_custom_call.1} parent=0
    _
  %s8 = ssub.s32 1, %s6
  %s9 = scalar_select 0, %s8, %s6
  $region1: #{tpu_custom_call.1} parent=0
    #allocation2 [shape = 'u8[4096]{0}', space=vmem, size = 0x1000, scoped, tag = 'input window, operand 0, single buffered']
    #allocation3 [shape = 's32[1]{0}', space=sflag, size = 0x4, scoped, tag = 'scoped memory for tpu_custom_call.1']
    #allocation4 [shape = 's32[1]{0}', space=sflag, size = 0x4, scoped, tag = 'scoped memory for tpu_custom_call.1']
    #allocation5 [shape = 'u8[131072]{0}', space=vmem, size = 0x20000, scoped, tag = 'input window, operand 1, single buffered']
    #allocation6 [shape = 's32[1]{0}', space=sflag, size = 0x4, scoped, tag = 'scoped memory for tpu_custom_call.1']
    #allocation7 [shape = 'u8[1024]{0}', space=vmem, size = 0x400, scoped, tag = 'input window, operand 2, single buffered']
    #allocation8 [shape = 'u8[524288]{0}', space=vmem, size = 0x80000, scoped, tag = 'input window, operand 3, single buffered']
    #allocation9 [shape = 's32[1]{0}', space=sflag, size = 0x4, scoped, tag = 'scoped memory for tpu_custom_call.1']
    #allocation10 [shape = 'u8[2048]{0}', space=vmem, size = 0x800, scoped, tag = 'input window, operand 4, single buffered']
    #allocation11 [shape = 'u8[16384]{0}', space=vmem, size = 0x4000, scoped, tag = 'output window, operand 0, single buffered']
    %10 = vsyncpa [#allocation3], 0
    %11 = vsyncpa [#allocation6], 0
    %12 = vsyncpa [#allocation9], 0
    %13 = vsyncpa [#allocation4], 0
    // Predicated region
    $region2: #{tpu_custom_call.1} parent=1 // pred_check
      _
    $region3: #{tpu_custom_call.1} parent=1 // pred_check_branch
      %15 = sbr.rel (0) target = $region5
    $region4: #{tpu_custom_call.1} parent=1 // pred_region
      %17 = vsyncadd [#allocation3], 0
      %s19 = sshll.u32 %s0, 4
      %s20 = int_to_ptr.hbm [resolvable:$true] %s19
      %s21 = sshll.u32 [#allocation2], 4
      %s22 = int_to_ptr.vmem [resolvable:$true] %s21
      %24 = dma.hbm_to_vmem [thread:$0]  %s20, 128, %s22, [#allocation3]
    $region5: #{tpu_custom_call.1} parent=1 // pred_fallthru
      _
    // Predicated region
    $region6: #{tpu_custom_call.1} parent=1 // pred_check
      _
    $region7: #{tpu_custom_call.1} parent=1 // pred_check_branch
      %26 = sbr.rel (0) target = $region9
    $region8: #{tpu_custom_call.1} parent=1 // pred_region
      %28 = vsyncadd [#allocation6], 0
      %s29 = sshll.u32 %s1, 4
      %s30 = int_to_ptr.hbm [resolvable:$true] %s29
      %s31 = sshll.u32 [#allocation5], 4
      %s32 = int_to_ptr.vmem [resolvable:$true] %s31
      %37 = dma.hbm_to_vmem [thread:$0]  %s30, 4096, %s32, [#allocation6], 256, 256, 16
    $region9: #{tpu_custom_call.1} parent=1 // pred_fallthru
      _
    // Predicated region
    $region10: #{tpu_custom_call.1} parent=1 // pred_check
      _
    $region11: #{tpu_custom_call.1} parent=1 // pred_check_branch
      %39 = sbr.rel (0) target = $region13
    $region12: #{tpu_custom_call.1} parent=1 // pred_region
      %41 = vsyncadd [#allocation6], 0
      %s43 = sshll.u32 %s2, 4
      %s44 = int_to_ptr.hbm [resolvable:$true] %s43
      %s45 = sshll.u32 [#allocation7], 4
      %s46 = int_to_ptr.vmem [resolvable:$true] %s45
      %48 = dma.hbm_to_vmem [thread:$0]  %s44, 32, %s46, [#allocation6]
    $region13: #{tpu_custom_call.1} parent=1 // pred_fallthru
      _
    // Predicated region
    $region14: #{tpu_custom_call.1} parent=1 // pred_check
      _
    $region15: #{tpu_custom_call.1} parent=1 // pred_check_branch
      %50 = sbr.rel (0) target = $region17
    $region16: #{tpu_custom_call.1} parent=1 // pred_region
      %52 = vsyncadd [#allocation9], 0
      %s53 = sshll.u32 %s3, 4
      %s54 = int_to_ptr.hbm [resolvable:$true] %s53
      %s55 = sshll.u32 [#allocation8], 4
      %s56 = int_to_ptr.vmem [resolvable:$true] %s55
      %61 = dma.hbm_to_vmem [thread:$0]  %s54, 16384, %s56, [#allocation9], 512, 512, 32
    $region17: #{tpu_custom_call.1} parent=1 // pred_fallthru
      _
    // Predicated region
    $region18: #{tpu_custom_call.1} parent=1 // pred_check
      _
    $region19: #{tpu_custom_call.1} parent=1 // pred_check_branch
      %63 = sbr.rel (0) target = $region21
    $region20: #{tpu_custom_call.1} parent=1 // pred_region
      %65 = vsyncadd [#allocation9], 0
      %s67 = sshll.u32 %s4, 4
      %s68 = int_to_ptr.hbm [resolvable:$true] %s67
      %s69 = sshll.u32 [#allocation10], 4
      %s70 = int_to_ptr.vmem [resolvable:$true] %s69
      %72 = dma.hbm_to_vmem [thread:$0]  %s68, 64, %s70, [#allocation9]
    $region21: #{tpu_custom_call.1} parent=1 // pred_fallthru
      _
    // Predicated region
    $region22: #{tpu_custom_call.1} parent=1 // pred_check
      _
    $region23: #{tpu_custom_call.1} parent=1 // pred_check_branch
      %74 = sbr.rel (0) target = $region25
    $region24: #{tpu_custom_call.1} parent=1 // pred_region
      %76 = dma.done [#allocation3], 128
    $region25: #{tpu_custom_call.1} parent=1 // pred_fallthru
      _
    // Predicated region
    $region26: #{tpu_custom_call.1} parent=1 // pred_check
      _
    $region27: #{tpu_custom_call.1} parent=1 // pred_check_branch
      %78 = sbr.rel (0) target = $region29
    $region28: #{tpu_custom_call.1} parent=1 // pred_region
      %80 = dma.done [#allocation6], 4096
    $region29: #{tpu_custom_call.1} parent=1 // pred_fallthru
      _
    // Predicated region
    $region30: #{tpu_custom_call.1} parent=1 // pred_check
      _
    $region31: #{tpu_custom_call.1} parent=1 // pred_check_branch
      %82 = sbr.rel (0) target = $region33
    $region32: #{tpu_custom_call.1} parent=1 // pred_region
      %84 = dma.done [#allocation6], 32
    $region33: #{tpu_custom_call.1} parent=1 // pred_fallthru
      _
    // Predicated region
    $region34: #{tpu_custom_call.1} parent=1 // pred_check
      _
    $region35: #{tpu_custom_call.1} parent=1 // pred_check_branch
      %86 = sbr.rel (0) target = $region37
    $region36: #{tpu_custom_call.1} parent=1 // pred_region
      %88 = dma.done [#allocation9], 16384
    $region37: #{tpu_custom_call.1} parent=1 // pred_fallthru
      _
    // Predicated region
    $region38: #{tpu_custom_call.1} parent=1 // pred_check
      _
    $region39: #{tpu_custom_call.1} parent=1 // pred_check_branch
      %90 = sbr.rel (0) target = $region41
    $region40: #{tpu_custom_call.1} parent=1 // pred_region
      %92 = dma.done [#allocation9], 64
    $region41: #{tpu_custom_call.1} parent=1 // pred_fallthru
      _
    %v93 = vld [vmem:[#allocation2] sm:$0xff]
    %v94 = vld [vmem:[#allocation5] sm:$0xff]
    %v95 = vld [vmem:[#allocation5 + $0x8] sm:$0xff]
    %v96 = vld [vmem:[#allocation5 + $0x10] sm:$0xff]
    %v97 = vld [vmem:[#allocation5 + $0x18] sm:$0xff]
    %v98 = vld [vmem:[#allocation5 + $0x20] sm:$0xff]
    %v99 = vld [vmem:[#allocation5 + $0x28] sm:$0xff]
    %v100 = vld [vmem:[#allocation5 + $0x30] sm:$0xff]
    %v101 = vld [vmem:[#allocation5 + $0x38] sm:$0xff]
    %v102 = vld [vmem:[#allocation5 + $0x40] sm:$0xff]
    %v103 = vld [vmem:[#allocation5 + $0x48] sm:$0xff]
    %v104 = vld [vmem:[#allocation5 + $0x50] sm:$0xff]
    %v105 = vld [vmem:[#allocation5 + $0x58] sm:$0xff]
    %v106 = vld [vmem:[#allocation5 + $0x60] sm:$0xff]
    %v107 = vld [vmem:[#allocation5 + $0x68] sm:$0xff]
    %v108 = vld [vmem:[#allocation5 + $0x70] sm:$0xff]
    %v109 = vld [vmem:[#allocation5 + $0x78] sm:$0xff]
    %v110 = vld [vmem:[#allocation5 + $0x80] sm:$0xff]
    %v111 = vld [vmem:[#allocation5 + $0x88] sm:$0xff]
    %v112 = vld [vmem:[#allocation5 + $0x90] sm:$0xff]
    %v113 = vld [vmem:[#allocation5 + $0x98] sm:$0xff]
    %v114 = vld [vmem:[#allocation5 + $0xa0] sm:$0xff]
    %v115 = vld [vmem:[#allocation5 + $0xa8] sm:$0xff]
    %v116 = vld [vmem:[#allocation5 + $0xb0] sm:$0xff]
    %v117 = vld [vmem:[#allocation5 + $0xb8] sm:$0xff]
    %v118 = vld [vmem:[#allocation5 + $0xc0] sm:$0xff]
    %v119 = vld [vmem:[#allocation5 + $0xc8] sm:$0xff]
    %v120 = vld [vmem:[#allocation5 + $0xd0] sm:$0xff]
    %v121 = vld [vmem:[#allocation5 + $0xd8] sm:$0xff]
    %v122 = vld [vmem:[#allocation5 + $0xe0] sm:$0xff]
    %v123 = vld [vmem:[#allocation5 + $0xe8] sm:$0xff]
    %v124 = vld [vmem:[#allocation5 + $0xf0] sm:$0xff]
    %v125 = vld [vmem:[#allocation5 + $0xf8] sm:$0xff]
    %v126 = vld [vmem:[#allocation7] sm:$0x3]
    %v128 = vperm.slane %v126, 0
    %v129 = vperm.slane %v126, 1
    %132 = vmatpush.msra.mxu0 %v124
    %133 = vmatpush.msra.mxu0 %v122
    %134 = vmatpush.msra.mxu0 %v120
    %135 = vmatpush.msra.mxu0 %v118
    %136 = vmatpush.msra.mxu0 %v116
    %137 = vmatpush.msra.mxu0 %v114
    %138 = vmatpush.msra.mxu0 %v112
    %139 = vmatpush.msra.mxu0 %v110
    %140 = vmatpush.msra.mxu0 %v108
    %141 = vmatpush.msra.mxu0 %v106
    %142 = vmatpush.msra.mxu0 %v104
    %143 = vmatpush.msra.mxu0 %v102
    %144 = vmatpush.msra.mxu0 %v100
    %145 = vmatpush.msra.mxu0 %v98
    %146 = vmatpush.msra.mxu0 %v96
    %147 = vmatpush.msra.mxu0 %v94
    %148 = vmatmul.f32.gmra.mxu0 %v93
    %v149 = vpop.f32.mrf.mxu0
    %v150 = vadd.f32 %v128, %v149
    %151 = vdwg.mxu0
    %152 = vmatpush.msra.mxu0 %v125
    %153 = vmatpush.msra.mxu0 %v123
    %154 = vmatpush.msra.mxu0 %v121
    %155 = vmatpush.msra.mxu0 %v119
    %156 = vmatpush.msra.mxu0 %v117
    %157 = vmatpush.msra.mxu0 %v115
    %158 = vmatpush.msra.mxu0 %v113
    %159 = vmatpush.msra.mxu0 %v111
    %160 = vmatpush.msra.mxu0 %v109
    %161 = vmatpush.msra.mxu0 %v107
    %162 = vmatpush.msra.mxu0 %v105
    %163 = vmatpush.msra.mxu0 %v103
    %164 = vmatpush.msra.mxu0 %v101
    %165 = vmatpush.msra.mxu0 %v99
    %166 = vmatpush.msra.mxu0 %v97
    %167 = vmatpush.msra.mxu0 %v95
    %168 = vmatmul.f32.gmra.mxu0 %v93
    %v169 = vpop.f32.mrf.mxu0
    %v170 = vadd.f32 %v129, %v169
    %171 = vdwg.mxu0
    %v172 = vmax.f32 %v150, 0.0
    %v173 = vmax.f32 %v170, 0.0
    %v174 = vld [vmem:[#allocation8] sm:$0xff]
    %v175 = vld [vmem:[#allocation8 + $0x8] sm:$0xff]
    %v176 = vld [vmem:[#allocation8 + $0x10] sm:$0xff]
    %v177 = vld [vmem:[#allocation8 + $0x18] sm:$0xff]
    %v178 = vld [vmem:[#allocation8 + $0x20] sm:$0xff]
    %v179 = vld [vmem:[#allocation8 + $0x28] sm:$0xff]
    %v180 = vld [vmem:[#allocation8 + $0x30] sm:$0xff]
    %v181 = vld [vmem:[#allocation8 + $0x38] sm:$0xff]
    %v182 = vld [vmem:[#allocation8 + $0x40] sm:$0xff]
    %v183 = vld [vmem:[#allocation8 + $0x48] sm:$0xff]
    %v184 = vld [vmem:[#allocation8 + $0x50] sm:$0xff]
    %v185 = vld [vmem:[#allocation8 + $0x58] sm:$0xff]
    %v186 = vld [vmem:[#allocation8 + $0x60] sm:$0xff]
    %v187 = vld [vmem:[#allocation8 + $0x68] sm:$0xff]
    %v188 = vld [vmem:[#allocation8 + $0x70] sm:$0xff]
    %v189 = vld [vmem:[#allocation8 + $0x78] sm:$0xff]
    %v190 = vld [vmem:[#allocation8 + $0x80] sm:$0xff]
    %v191 = vld [vmem:[#allocation8 + $0x88] sm:$0xff]
    %v192 = vld [vmem:[#allocation8 + $0x90] sm:$0xff]
    %v193 = vld [vmem:[#allocation8 + $0x98] sm:$0xff]
    %v194 = vld [vmem:[#allocation8 + $0xa0] sm:$0xff]
    %v195 = vld [vmem:[#allocation8 + $0xa8] sm:$0xff]
    %v196 = vld [vmem:[#allocation8 + $0xb0] sm:$0xff]
    %v197 = vld [vmem:[#allocation8 + $0xb8] sm:$0xff]
    %v198 = vld [vmem:[#allocation8 + $0xc0] sm:$0xff]
    %v199 = vld [vmem:[#allocation8 + $0xc8] sm:$0xff]
    %v200 = vld [vmem:[#allocation8 + $0xd0] sm:$0xff]
    %v201 = vld [vmem:[#allocation8 + $0xd8] sm:$0xff]
    %v202 = vld [vmem:[#allocation8 + $0xe0] sm:$0xff]
    %v203 = vld [vmem:[#allocation8 + $0xe8] sm:$0xff]
    %v204 = vld [vmem:[#allocation8 + $0xf0] sm:$0xff]
    %v205 = vld [vmem:[#allocation8 + $0xf8] sm:$0xff]
    %v206 = vld [vmem:[#allocation8 + $0x100] sm:$0xff]
    %v207 = vld [vmem:[#allocation8 + $0x108] sm:$0xff]
    %v208 = vld [vmem:[#allocation8 + $0x110] sm:$0xff]
    %v209 = vld [vmem:[#allocation8 + $0x118] sm:$0xff]
    %v210 = vld [vmem:[#allocation8 + $0x120] sm:$0xff]
    %v211 = vld [vmem:[#allocation8 + $0x128] sm:$0xff]
    %v212 = vld [vmem:[#allocation8 + $0x130] sm:$0xff]
    %v213 = vld [vmem:[#allocation8 + $0x138] sm:$0xff]
    %v214 = vld [vmem:[#allocation8 + $0x140] sm:$0xff]
    %v215 = vld [vmem:[#allocation8 + $0x148] sm:$0xff]
    %v216 = vld [vmem:[#allocation8 + $0x150] sm:$0xff]
    %v217 = vld [vmem:[#allocation8 + $0x158] sm:$0xff]
    %v218 = vld [vmem:[#allocation8 + $0x160] sm:$0xff]
    %v219 = vld [vmem:[#allocation8 + $0x168] sm:$0xff]
    %v220 = vld [vmem:[#allocation8 + $0x170] sm:$0xff]
    %v221 = vld [vmem:[#allocation8 + $0x178] sm:$0xff]
    %v222 = vld [vmem:[#allocation8 + $0x180] sm:$0xff]
    %v223 = vld [vmem:[#allocation8 + $0x188] sm:$0xff]
    %v224 = vld [vmem:[#allocation8 + $0x190] sm:$0xff]
    %v225 = vld [vmem:[#allocation8 + $0x198] sm:$0xff]
    %v226 = vld [vmem:[#allocation8 + $0x1a0] sm:$0xff]
    %v227 = vld [vmem:[#allocation8 + $0x1a8] sm:$0xff]
    %v228 = vld [vmem:[#allocation8 + $0x1b0] sm:$0xff]
    %v229 = vld [vmem:[#allocation8 + $0x1b8] sm:$0xff]
    %v230 = vld [vmem:[#allocation8 + $0x1c0] sm:$0xff]
    %v231 = vld [vmem:[#allocation8 + $0x1c8] sm:$0xff]
    %v232 = vld [vmem:[#allocation8 + $0x1d0] sm:$0xff]
    %v233 = vld [vmem:[#allocation8 + $0x1d8] sm:$0xff]
    %v234 = vld [vmem:[#allocation8 + $0x1e0] sm:$0xff]
    %v235 = vld [vmem:[#allocation8 + $0x1e8] sm:$0xff]
    %v236 = vld [vmem:[#allocation8 + $0x1f0] sm:$0xff]
    %v237 = vld [vmem:[#allocation8 + $0x1f8] sm:$0xff]
    %v238 = vld [vmem:[#allocation8 + $0x200] sm:$0xff]
    %v239 = vld [vmem:[#allocation8 + $0x208] sm:$0xff]
    %v240 = vld [vmem:[#allocation8 + $0x210] sm:$0xff]
    %v241 = vld [vmem:[#allocation8 + $0x218] sm:$0xff]
    %v242 = vld [vmem:[#allocation8 + $0x220] sm:$0xff]
    %v243 = vld [vmem:[#allocation8 + $0x228] sm:$0xff]
    %v244 = vld [vmem:[#allocation8 + $0x230] sm:$0xff]
    %v245 = vld [vmem:[#allocation8 + $0x238] sm:$0xff]
    %v246 = vld [vmem:[#allocation8 + $0x240] sm:$0xff]
    %v247 = vld [vmem:[#allocation8 + $0x248] sm:$0xff]
    %v248 = vld [vmem:[#allocation8 + $0x250] sm:$0xff]
    %v249 = vld [vmem:[#allocation8 + $0x258] sm:$0xff]
    %v250 = vld [vmem:[#allocation8 + $0x260] sm:$0xff]
    %v251 = vld [vmem:[#allocation8 + $0x268] sm:$0xff]
    %v252 = vld [vmem:[#allocation8 + $0x270] sm:$0xff]
    %v253 = vld [vmem:[#allocation8 + $0x278] sm:$0xff]
    %v254 = vld [vmem:[#allocation8 + $0x280] sm:$0xff]
    %v255 = vld [vmem:[#allocation8 + $0x288] sm:$0xff]
    %v256 = vld [vmem:[#allocation8 + $0x290] sm:$0xff]
    %v257 = vld [vmem:[#allocation8 + $0x298] sm:$0xff]
    %v258 = vld [vmem:[#allocation8 + $0x2a0] sm:$0xff]
    %v259 = vld [vmem:[#allocation8 + $0x2a8] sm:$0xff]
    %v260 = vld [vmem:[#allocation8 + $0x2b0] sm:$0xff]
    %v261 = vld [vmem:[#allocation8 + $0x2b8] sm:$0xff]
    %v262 = vld [vmem:[#allocation8 + $0x2c0] sm:$0xff]
    %v263 = vld [vmem:[#allocation8 + $0x2c8] sm:$0xff]
    %v264 = vld [vmem:[#allocation8 + $0x2d0] sm:$0xff]
    %v265 = vld [vmem:[#allocation8 + $0x2d8] sm:$0xff]
    %v266 = vld [vmem:[#allocation8 + $0x2e0] sm:$0xff]
    %v267 = vld [vmem:[#allocation8 + $0x2e8] sm:$0xff]
    %v268 = vld [vmem:[#allocation8 + $0x2f0] sm:$0xff]
    %v269 = vld [vmem:[#allocation8 + $0x2f8] sm:$0xff]
    %v270 = vld [vmem:[#allocation8 + $0x300] sm:$0xff]
    %v271 = vld [vmem:[#allocation8 + $0x308] sm:$0xff]
    %v272 = vld [vmem:[#allocation8 + $0x310] sm:$0xff]
    %v273 = vld [vmem:[#allocation8 + $0x318] sm:$0xff]
    %v274 = vld [vmem:[#allocation8 + $0x320] sm:$0xff]
    %v275 = vld [vmem:[#allocation8 + $0x328] sm:$0xff]
    %v276 = vld [vmem:[#allocation8 + $0x330] sm:$0xff]
    %v277 = vld [vmem:[#allocation8 + $0x338] sm:$0xff]
    %v278 = vld [vmem:[#allocation8 + $0x340] sm:$0xff]
    %v279 = vld [vmem:[#allocation8 + $0x348] sm:$0xff]
    %v280 = vld [vmem:[#allocation8 + $0x350] sm:$0xff]
    %v281 = vld [vmem:[#allocation8 + $0x358] sm:$0xff]
    %v282 = vld [vmem:[#allocation8 + $0x360] sm:$0xff]
    %v283 = vld [vmem:[#allocation8 + $0x368] sm:$0xff]
    %v284 = vld [vmem:[#allocation8 + $0x370] sm:$0xff]
    %v285 = vld [vmem:[#allocation8 + $0x378] sm:$0xff]
    %v286 = vld [vmem:[#allocation8 + $0x380] sm:$0xff]
    %v287 = vld [vmem:[#allocation8 + $0x388] sm:$0xff]
    %v288 = vld [vmem:[#allocation8 + $0x390] sm:$0xff]
    %v289 = vld [vmem:[#allocation8 + $0x398] sm:$0xff]
    %v290 = vld [vmem:[#allocation8 + $0x3a0] sm:$0xff]
    %v291 = vld [vmem:[#allocation8 + $0x3a8] sm:$0xff]
    %v292 = vld [vmem:[#allocation8 + $0x3b0] sm:$0xff]
    %v293 = vld [vmem:[#allocation8 + $0x3b8] sm:$0xff]
    %v294 = vld [vmem:[#allocation8 + $0x3c0] sm:$0xff]
    %v295 = vld [vmem:[#allocation8 + $0x3c8] sm:$0xff]
    %v296 = vld [vmem:[#allocation8 + $0x3d0] sm:$0xff]
    %v297 = vld [vmem:[#allocation8 + $0x3d8] sm:$0xff]
    %v298 = vld [vmem:[#allocation8 + $0x3e0] sm:$0xff]
    %v299 = vld [vmem:[#allocation8 + $0x3e8] sm:$0xff]
    %v300 = vld [vmem:[#allocation8 + $0x3f0] sm:$0xff]
    %v301 = vld [vmem:[#allocation8 + $0x3f8] sm:$0xff]
    %v302 = vld [vmem:[#allocation10] sm:$0xf]
    %v304 = vperm.slane %v302, 0
    %v305 = vperm.slane %v302, 1
    %v306 = vperm.slane %v302, 2
    %v307 = vperm.slane %v302, 3
    %312 = vmatpush.msra.mxu0 %v234
    %313 = vmatpush.msra.mxu0 %v230
    %314 = vmatpush.msra.mxu0 %v226
    %315 = vmatpush.msra.mxu0 %v222
    %316 = vmatpush.msra.mxu0 %v218
    %317 = vmatpush.msra.mxu0 %v214
    %318 = vmatpush.msra.mxu0 %v210
    %319 = vmatpush.msra.mxu0 %v206
    %320 = vmatpush.msra.mxu0 %v202
    %321 = vmatpush.msra.mxu0 %v198
    %322 = vmatpush.msra.mxu0 %v194
    %323 = vmatpush.msra.mxu0 %v190
    %324 = vmatpush.msra.mxu0 %v186
    %325 = vmatpush.msra.mxu0 %v182
    %326 = vmatpush.msra.mxu0 %v178
    %327 = vmatpush.msra.mxu0 %v174
    %328 = vmatmul.f32.gmra.mxu0 %v172
    %v329 = vpop.f32.mrf.mxu0
    %v330 = vadd.f32 %v304, %v329
    %331 = vdwg.mxu0
    %332 = vmatpush.msra.mxu0 %v298
    %333 = vmatpush.msra.mxu0 %v294
    %334 = vmatpush.msra.mxu0 %v290
    %335 = vmatpush.msra.mxu0 %v286
    %336 = vmatpush.msra.mxu0 %v282
    %337 = vmatpush.msra.mxu0 %v278
    %338 = vmatpush.msra.mxu0 %v274
    %339 = vmatpush.msra.mxu0 %v270
    %340 = vmatpush.msra.mxu0 %v266
    %341 = vmatpush.msra.mxu0 %v262
    %342 = vmatpush.msra.mxu0 %v258
    %343 = vmatpush.msra.mxu0 %v254
    %344 = vmatpush.msra.mxu0 %v250
    %345 = vmatpush.msra.mxu0 %v246
    %346 = vmatpush.msra.mxu0 %v242
    %347 = vmatpush.msra.mxu0 %v238
    %348 = vmatmul.f32.gmra.mxu0 %v173
    %v349 = vpop.f32.mrf.mxu0
    %v350 = vadd.f32 %v330, %v349
    %351 = vdwg.mxu0
    %352 = vmatpush.msra.mxu0 %v235
    %353 = vmatpush.msra.mxu0 %v231
    %354 = vmatpush.msra.mxu0 %v227
    %355 = vmatpush.msra.mxu0 %v223
    %356 = vmatpush.msra.mxu0 %v219
    %357 = vmatpush.msra.mxu0 %v215
    %358 = vmatpush.msra.mxu0 %v211
    %359 = vmatpush.msra.mxu0 %v207
    %360 = vmatpush.msra.mxu0 %v203
    %361 = vmatpush.msra.mxu0 %v199
    %362 = vmatpush.msra.mxu0 %v195
    %363 = vmatpush.msra.mxu0 %v191
    %364 = vmatpush.msra.mxu0 %v187
    %365 = vmatpush.msra.mxu0 %v183
    %366 = vmatpush.msra.mxu0 %v179
    %367 = vmatpush.msra.mxu0 %v175
    %368 = vmatmul.f32.gmra.mxu0 %v172
    %v369 = vpop.f32.mrf.mxu0
    %v370 = vadd.f32 %v305, %v369
    %371 = vdwg.mxu0
    %372 = vmatpush.msra.mxu0 %v299
    %373 = vmatpush.msra.mxu0 %v295
    %374 = vmatpush.msra.mxu0 %v291
    %375 = vmatpush.msra.mxu0 %v287
    %376 = vmatpush.msra.mxu0 %v283
    %377 = vmatpush.msra.mxu0 %v279
    %378 = vmatpush.msra.mxu0 %v275
    %379 = vmatpush.msra.mxu0 %v271
    %380 = vmatpush.msra.mxu0 %v267
    %381 = vmatpush.msra.mxu0 %v263
    %382 = vmatpush.msra.mxu0 %v259
    %383 = vmatpush.msra.mxu0 %v255
    %384 = vmatpush.msra.mxu0 %v251
    %385 = vmatpush.msra.mxu0 %v247
    %386 = vmatpush.msra.mxu0 %v243
    %387 = vmatpush.msra.mxu0 %v239
    %388 = vmatmul.f32.gmra.mxu0 %v173
    %v389 = vpop.f32.mrf.mxu0
    %v390 = vadd.f32 %v370, %v389
    %391 = vdwg.mxu0
    %392 = vmatpush.msra.mxu0 %v236
    %393 = vmatpush.msra.mxu0 %v232
    %394 = vmatpush.msra.mxu0 %v228
    %395 = vmatpush.msra.mxu0 %v224
    %396 = vmatpush.msra.mxu0 %v220
    %397 = vmatpush.msra.mxu0 %v216
    %398 = vmatpush.msra.mxu0 %v212
    %399 = vmatpush.msra.mxu0 %v208
    %400 = vmatpush.msra.mxu0 %v204
    %401 = vmatpush.msra.mxu0 %v200
    %402 = vmatpush.msra.mxu0 %v196
    %403 = vmatpush.msra.mxu0 %v192
    %404 = vmatpush.msra.mxu0 %v188
    %405 = vmatpush.msra.mxu0 %v184
    %406 = vmatpush.msra.mxu0 %v180
    %407 = vmatpush.msra.mxu0 %v176
    %408 = vmatmul.f32.gmra.mxu0 %v172
    %v409 = vpop.f32.mrf.mxu0
    %v410 = vadd.f32 %v306, %v409
    %411 = vdwg.mxu0
    %412 = vmatpush.msra.mxu0 %v300
    %413 = vmatpush.msra.mxu0 %v296
    %414 = vmatpush.msra.mxu0 %v292
    %415 = vmatpush.msra.mxu0 %v288
    %416 = vmatpush.msra.mxu0 %v284
    %417 = vmatpush.msra.mxu0 %v280
    %418 = vmatpush.msra.mxu0 %v276
    %419 = vmatpush.msra.mxu0 %v272
    %420 = vmatpush.msra.mxu0 %v268
    %421 = vmatpush.msra.mxu0 %v264
    %422 = vmatpush.msra.mxu0 %v260
    %423 = vmatpush.msra.mxu0 %v256
    %424 = vmatpush.msra.mxu0 %v252
    %425 = vmatpush.msra.mxu0 %v248
    %426 = vmatpush.msra.mxu0 %v244
    %427 = vmatpush.msra.mxu0 %v240
    %428 = vmatmul.f32.gmra.mxu0 %v173
    %v429 = vpop.f32.mrf.mxu0
    %v430 = vadd.f32 %v410, %v429
    %431 = vdwg.mxu0
    %432 = vmatpush.msra.mxu0 %v237
    %433 = vmatpush.msra.mxu0 %v233
    %434 = vmatpush.msra.mxu0 %v229
    %435 = vmatpush.msra.mxu0 %v225
    %436 = vmatpush.msra.mxu0 %v221
    %437 = vmatpush.msra.mxu0 %v217
    %438 = vmatpush.msra.mxu0 %v213
    %439 = vmatpush.msra.mxu0 %v209
    %440 = vmatpush.msra.mxu0 %v205
    %441 = vmatpush.msra.mxu0 %v201
    %442 = vmatpush.msra.mxu0 %v197
    %443 = vmatpush.msra.mxu0 %v193
    %444 = vmatpush.msra.mxu0 %v189
    %445 = vmatpush.msra.mxu0 %v185
    %446 = vmatpush.msra.mxu0 %v181
    %447 = vmatpush.msra.mxu0 %v177
    %448 = vmatmul.f32.gmra.mxu0 %v172
    %v449 = vpop.f32.mrf.mxu0
    %v450 = vadd.f32 %v307, %v449
    %451 = vdwg.mxu0
    %452 = vmatpush.msra.mxu0 %v301
    %453 = vmatpush.msra.mxu0 %v297
    %454 = vmatpush.msra.mxu0 %v293
    %455 = vmatpush.msra.mxu0 %v289
    %456 = vmatpush.msra.mxu0 %v285
    %457 = vmatpush.msra.mxu0 %v281
    %458 = vmatpush.msra.mxu0 %v277
    %459 = vmatpush.msra.mxu0 %v273
    %460 = vmatpush.msra.mxu0 %v269
    %461 = vmatpush.msra.mxu0 %v265
    %462 = vmatpush.msra.mxu0 %v261
    %463 = vmatpush.msra.mxu0 %v257
    %464 = vmatpush.msra.mxu0 %v253
    %465 = vmatpush.msra.mxu0 %v249
    %466 = vmatpush.msra.mxu0 %v245
    %467 = vmatpush.msra.mxu0 %v241
    %468 = vmatmul.f32.gmra.mxu0 %v173
    %v469 = vpop.f32.mrf.mxu0
    %v470 = vadd.f32 %v450, %v469
    %471 = vdwg.mxu0
    %v472 = vxor.u32 %v350, 2147483648
    %v473 = vxor.u32 %v390, 2147483648
    %v474 = vxor.u32 %v430, 2147483648
    %v475 = vxor.u32 %v470, 2147483648
    %v476 = vmul.f32 %v472, 1.442695
    %v477 = vpow.pop %v476
    %v478 = vmul.f32 %v473, 1.442695
    %v479 = vpow.pop %v478
    %v480 = vmul.f32 %v474, 1.442695
    %v481 = vpow.pop %v480
    %v482 = vmul.f32 %v475, 1.442695
    %v483 = vpow.pop %v482
    %v484 = vadd.f32 %v477, 1.0
    %v485 = vadd.f32 %v479, 1.0
    %v486 = vadd.f32 %v481, 1.0
    %v487 = vadd.f32 %v483, 1.0
    %v488 = vrcp.pop %v484
    %v489 = vmul.f32 %v484, %v488
    %v490 = vsub.f32 1.0, %v489
    %v491 = vmul.f32 %v488, %v490
    %v492 = vadd.f32 %v488, %v491
    %vm493 = vweird.f32 %v484
    %vm494 = vweird.f32 %v488
    %vm495 = vmor %vm493, %vm494
    %v496 = vsel %vm495, %v488, %v492
    %v497 = vand.u32 2147483647, %v484
    %vm498 = vcmp.eq.f32.partialorder %v497, 8.507059e+37
    %v499 = vand.u32 %v484, 2147483648
    %v500 = vor.u32 1.1754944e-38, %v499
    %v501 = vsel %vm498, %v500, %v496
    %v502 = vmul.f32 1.0, %v501
    %v503 = vrcp.pop %v485
    %v504 = vmul.f32 %v485, %v503
    %v505 = vsub.f32 1.0, %v504
    %v506 = vmul.f32 %v503, %v505
    %v507 = vadd.f32 %v503, %v506
    %vm508 = vweird.f32 %v485
    %vm509 = vweird.f32 %v503
    %vm510 = vmor %vm508, %vm509
    %v511 = vsel %vm510, %v503, %v507
    %v512 = vand.u32 2147483647, %v485
    %vm513 = vcmp.eq.f32.partialorder %v512, 8.507059e+37
    %v514 = vand.u32 %v485, 2147483648
    %v515 = vor.u32 1.1754944e-38, %v514
    %v516 = vsel %vm513, %v515, %v511
    %v517 = vmul.f32 1.0, %v516
    %v518 = vrcp.pop %v486
    %v519 = vmul.f32 %v486, %v518
    %v520 = vsub.f32 1.0, %v519
    %v521 = vmul.f32 %v518, %v520
    %v522 = vadd.f32 %v518, %v521
    %vm523 = vweird.f32 %v486
    %vm524 = vweird.f32 %v518
    %vm525 = vmor %vm523, %vm524
    %v526 = vsel %vm525, %v518, %v522
    %v527 = vand.u32 2147483647, %v486
    %vm528 = vcmp.eq.f32.partialorder %v527, 8.507059e+37
    %v529 = vand.u32 %v486, 2147483648
    %v530 = vor.u32 1.1754944e-38, %v529
    %v531 = vsel %vm528, %v530, %v526
    %v532 = vmul.f32 1.0, %v531
    %v533 = vrcp.pop %v487
    %v534 = vmul.f32 %v487, %v533
    %v535 = vsub.f32 1.0, %v534
    %v536 = vmul.f32 %v533, %v535
    %v537 = vadd.f32 %v533, %v536
    %vm538 = vweird.f32 %v487
    %vm539 = vweird.f32 %v533
    %vm540 = vmor %vm538, %vm539
    %v541 = vsel %vm540, %v533, %v537
    %v542 = vand.u32 2147483647, %v487
    %vm543 = vcmp.eq.f32.partialorder %v542, 8.507059e+37
    %v544 = vand.u32 %v487, 2147483648
    %v545 = vor.u32 1.1754944e-38, %v544
    %v546 = vsel %vm543, %v545, %v541
    %v547 = vmul.f32 1.0, %v546
    %548 = vst [vmem:[#allocation11] sm:$0xff] %v502
    %549 = vst [vmem:[#allocation11 + $0x8] sm:$0xff] %v517
    %550 = vst [vmem:[#allocation11 + $0x10] sm:$0xff] %v532
    %551 = vst [vmem:[#allocation11 + $0x18] sm:$0xff] %v547
    // Predicated region
    $region42: #{tpu_custom_call.1} parent=1 // pred_check
      _
    $region43: #{tpu_custom_call.1} parent=1 // pred_check_branch
      %553 = sbr.rel (0) target = $region45
    $region44: #{tpu_custom_call.1} parent=1 // pred_region
      %555 = vsyncadd [#allocation4], 0
      %s557 = sshll.u32 [#allocation11], 4
      %s558 = int_to_ptr.vmem [resolvable:$true] %s557
      %s559 = sshll.u32 %s5, 4
      %s560 = int_to_ptr.hbm [resolvable:$true] %s559
      %562 = dma.vmem_to_hbm [thread:$0]  %s558, 512, %s560, [#allocation4]
    $region45: #{tpu_custom_call.1} parent=1 // pred_fallthru
      _
    // Predicated region
    $region46: #{tpu_custom_call.1} parent=1 // pred_check
      _
    $region47: #{tpu_custom_call.1} parent=1 // pred_check_branch
      %564 = sbr.rel (0) target = $region49
    $region48: #{tpu_custom_call.1} parent=1 // pred_region
      %566 = dma.done [#allocation4], 512
    $region49: #{tpu_custom_call.1} parent=1 // pred_fallthru
      _
    %567 = vsyncpa [#allocation3], 1
    %568 = vsyncpa [#allocation6], 1
    %569 = vsyncpa [#allocation9], 1
    %570 = vsyncpa [#allocation4], 1

// kernel: tpu_custom_call.1
$region0: #{tpu_custom_call.1}
  #allocation0 [shape = 'u32[]', space=smem, size = 0x4, offset = 0x4, fixed_abs, tag = 'smem constant byte address 0x4 - core index']
  #allocation1 [shape = 'u32[72,128]{1,0:T(1,128)}', space=vmem, size = 0x9000, scoped, tag = 'internal scratch']
  %s0 = inlined_call_operand.hbm [shape: f32[8,128], index: 0, kind: input, shape index: {}]
  %s1 = inlined_call_operand.hbm [shape: f32[128,256], index: 1, kind: input, shape index: {}]
  %s2 = inlined_call_operand.hbm [shape: f32[1,256], index: 2, kind: input, shape index: {}]
  %s3 = inlined_call_operand.hbm [shape: f32[256,512], index: 3, kind: input, shape index: {}]
  %s4 = inlined_call_operand.hbm [shape: f32[1,512], index: 4, kind: input, shape index: {}]
  %s5 = inlined_call_operand.hbm [shape: f32[8,512], index: 5, kind: output, shape index: {}]
  %s6 = sld [smem:[#allocation0]]
  $region50: #{tpu_custom_call.1} parent=0
    _
  %s8 = ssub.s32 1, %s6
  %s9 = scalar_select 0, %s8, %s6
  $region1: #{tpu_custom_call.1} parent=0
    #allocation2 [shape = 'u8[4096]{0}', space=vmem, size = 0x1000, scoped, tag = 'input window, operand 0, single buffered']
    #allocation3 [shape = 's32[1]{0}', space=sflag, size = 0x4, scoped, tag = 'scoped memory for tpu_custom_call.1']
    #allocation4 [shape = 's32[1]{0}', space=sflag, size = 0x4, scoped, tag = 'scoped memory for tpu_custom_call.1']
    #allocation5 [shape = 'u8[131072]{0}', space=vmem, size = 0x20000, scoped, tag = 'input window, operand 1, single buffered']
    #allocation6 [shape = 's32[1]{0}', space=sflag, size = 0x4, scoped, tag = 'scoped memory for tpu_custom_call.1']
    #allocation7 [shape = 'u8[1024]{0}', space=vmem, size = 0x400, scoped, tag = 'input window, operand 2, single buffered']
    #allocation8 [shape = 'u8[524288]{0}', space=vmem, size = 0x80000, scoped, tag = 'input window, operand 3, single buffered']
    #allocation9 [shape = 's32[1]{0}', space=sflag, size = 0x4, scoped, tag = 'scoped memory for tpu_custom_call.1']
    #allocation10 [shape = 'u8[2048]{0}', space=vmem, size = 0x800, scoped, tag = 'input window, operand 4, single buffered']
    #allocation11 [shape = 'u8[16384]{0}', space=vmem, size = 0x4000, scoped, tag = 'output window, operand 0, single buffered']
    %10 = vsyncpa [#allocation3], 0
    %11 = vsyncpa [#allocation6], 0
    %12 = vsyncpa [#allocation9], 0
    %13 = vsyncpa [#allocation4], 0
    // Predicated region
    $region2: #{tpu_custom_call.1} parent=1 // pred_check
      _
    $region3: #{tpu_custom_call.1} parent=1 // pred_check_branch
      %15 = sbr.rel (0) target = $region5
    $region4: #{tpu_custom_call.1} parent=1 // pred_region
      %17 = vsyncadd [#allocation3], 0
      %s19 = sshll.u32 %s0, 4
      %s20 = int_to_ptr.hbm [resolvable:$true] %s19
      %s21 = sshll.u32 [#allocation2], 4
      %s22 = int_to_ptr.vmem [resolvable:$true] %s21
      %24 = dma.hbm_to_vmem [thread:$0]  %s20, 128, %s22, [#allocation3]
    $region5: #{tpu_custom_call.1} parent=1 // pred_fallthru
      _
    // Predicated region
    $region6: #{tpu_custom_call.1} parent=1 // pred_check
      _
    $region7: #{tpu_custom_call.1} parent=1 // pred_check_branch
      %26 = sbr.rel (0) target = $region9
    $region8: #{tpu_custom_call.1} parent=1 // pred_region
      %28 = vsyncadd [#allocation6], 0
      %s29 = sshll.u32 %s1, 4
      %s30 = int_to_ptr.hbm [resolvable:$true] %s29
      %s31 = sshll.u32 [#allocation5], 4
      %s32 = int_to_ptr.vmem [resolvable:$true] %s31
      %37 = dma.hbm_to_vmem [thread:$0]  %s30, 4096, %s32, [#allocation6], 256, 256, 16
    $region9: #{tpu_custom_call.1} parent=1 // pred_fallthru
      _
    // Predicated region
    $region10: #{tpu_custom_call.1} parent=1 // pred_check
      _
    $region11: #{tpu_custom_call.1} parent=1 // pred_check_branch
      %39 = sbr.rel (0) target = $region13
    $region12: #{tpu_custom_call.1} parent=1 // pred_region
      %41 = vsyncadd [#allocation6], 0
      %s43 = sshll.u32 %s2, 4
      %s44 = int_to_ptr.hbm [resolvable:$true] %s43
      %s45 = sshll.u32 [#allocation7], 4
      %s46 = int_to_ptr.vmem [resolvable:$true] %s45
      %48 = dma.hbm_to_vmem [thread:$0]  %s44, 32, %s46, [#allocation6]
    $region13: #{tpu_custom_call.1} parent=1 // pred_fallthru
      _
    // Predicated region
    $region14: #{tpu_custom_call.1} parent=1 // pred_check
      _
    $region15: #{tpu_custom_call.1} parent=1 // pred_check_branch
      %50 = sbr.rel (0) target = $region17
    $region16: #{tpu_custom_call.1} parent=1 // pred_region
      %52 = vsyncadd [#allocation9], 0
      %s53 = sshll.u32 %s3, 4
      %s54 = int_to_ptr.hbm [resolvable:$true] %s53
      %s55 = sshll.u32 [#allocation8], 4
      %s56 = int_to_ptr.vmem [resolvable:$true] %s55
      %61 = dma.hbm_to_vmem [thread:$0]  %s54, 16384, %s56, [#allocation9], 512, 512, 32
    $region17: #{tpu_custom_call.1} parent=1 // pred_fallthru
      _
    // Predicated region
    $region18: #{tpu_custom_call.1} parent=1 // pred_check
      _
    $region19: #{tpu_custom_call.1} parent=1 // pred_check_branch
      %63 = sbr.rel (0) target = $region21
    $region20: #{tpu_custom_call.1} parent=1 // pred_region
      %65 = vsyncadd [#allocation9], 0
      %s67 = sshll.u32 %s4, 4
      %s68 = int_to_ptr.hbm [resolvable:$true] %s67
      %s69 = sshll.u32 [#allocation10], 4
      %s70 = int_to_ptr.vmem [resolvable:$true] %s69
      %72 = dma.hbm_to_vmem [thread:$0]  %s68, 64, %s70, [#allocation9]
    $region21: #{tpu_custom_call.1} parent=1 // pred_fallthru
      _
    // Predicated region
    $region22: #{tpu_custom_call.1} parent=1 // pred_check
      _
    $region23: #{tpu_custom_call.1} parent=1 // pred_check_branch
      %74 = sbr.rel (0) target = $region25
    $region24: #{tpu_custom_call.1} parent=1 // pred_region
      %76 = dma.done [#allocation3], 128
    $region25: #{tpu_custom_call.1} parent=1 // pred_fallthru
      _
    // Predicated region
    $region26: #{tpu_custom_call.1} parent=1 // pred_check
      _
    $region27: #{tpu_custom_call.1} parent=1 // pred_check_branch
      %78 = sbr.rel (0) target = $region29
    $region28: #{tpu_custom_call.1} parent=1 // pred_region
      %80 = dma.done [#allocation6], 4096
    $region29: #{tpu_custom_call.1} parent=1 // pred_fallthru
      _
    // Predicated region
    $region30: #{tpu_custom_call.1} parent=1 // pred_check
      _
    $region31: #{tpu_custom_call.1} parent=1 // pred_check_branch
      %82 = sbr.rel (0) target = $region33
    $region32: #{tpu_custom_call.1} parent=1 // pred_region
      %84 = dma.done [#allocation6], 32
    $region33: #{tpu_custom_call.1} parent=1 // pred_fallthru
      _
    // Predicated region
    $region34: #{tpu_custom_call.1} parent=1 // pred_check
      _
    $region35: #{tpu_custom_call.1} parent=1 // pred_check_branch
      %86 = sbr.rel (0) target = $region37
    $region36: #{tpu_custom_call.1} parent=1 // pred_region
      %88 = dma.done [#allocation9], 16384
    $region37: #{tpu_custom_call.1} parent=1 // pred_fallthru
      _
    // Predicated region
    $region38: #{tpu_custom_call.1} parent=1 // pred_check
      _
    $region39: #{tpu_custom_call.1} parent=1 // pred_check_branch
      %90 = sbr.rel (0) target = $region41
    $region40: #{tpu_custom_call.1} parent=1 // pred_region
      %92 = dma.done [#allocation9], 64
    $region41: #{tpu_custom_call.1} parent=1 // pred_fallthru
      _
    %v93 = vld [vmem:[#allocation2] sm:$0xff]
    %v94 = vld [vmem:[#allocation5] sm:$0xff]
    %v95 = vld [vmem:[#allocation5 + $0x8] sm:$0xff]
    %v96 = vld [vmem:[#allocation5 + $0x10] sm:$0xff]
    %v97 = vld [vmem:[#allocation5 + $0x18] sm:$0xff]
    %v98 = vld [vmem:[#allocation5 + $0x20] sm:$0xff]
    %v99 = vld [vmem:[#allocation5 + $0x28] sm:$0xff]
    %v100 = vld [vmem:[#allocation5 + $0x30] sm:$0xff]
    %v101 = vld [vmem:[#allocation5 + $0x38] sm:$0xff]
    %v102 = vld [vmem:[#allocation5 + $0x40] sm:$0xff]
    %v103 = vld [vmem:[#allocation5 + $0x48] sm:$0xff]
    %v104 = vld [vmem:[#allocation5 + $0x50] sm:$0xff]
    %v105 = vld [vmem:[#allocation5 + $0x58] sm:$0xff]
    %v106 = vld [vmem:[#allocation5 + $0x60] sm:$0xff]
    %v107 = vld [vmem:[#allocation5 + $0x68] sm:$0xff]
    %v108 = vld [vmem:[#allocation5 + $0x70] sm:$0xff]
    %v109 = vld [vmem:[#allocation5 + $0x78] sm:$0xff]
    %v110 = vld [vmem:[#allocation5 + $0x80] sm:$0xff]
    %v111 = vld [vmem:[#allocation5 + $0x88] sm:$0xff]
    %v112 = vld [vmem:[#allocation5 + $0x90] sm:$0xff]
    %v113 = vld [vmem:[#allocation5 + $0x98] sm:$0xff]
    %v114 = vld [vmem:[#allocation5 + $0xa0] sm:$0xff]
    %v115 = vld [vmem:[#allocation5 + $0xa8] sm:$0xff]
    %v116 = vld [vmem:[#allocation5 + $0xb0] sm:$0xff]
    %v117 = vld [vmem:[#allocation5 + $0xb8] sm:$0xff]
    %v118 = vld [vmem:[#allocation5 + $0xc0] sm:$0xff]
    %v119 = vld [vmem:[#allocation5 + $0xc8] sm:$0xff]
    %v120 = vld [vmem:[#allocation5 + $0xd0] sm:$0xff]
    %v121 = vld [vmem:[#allocation5 + $0xd8] sm:$0xff]
    %v122 = vld [vmem:[#allocation5 + $0xe0] sm:$0xff]
    %v123 = vld [vmem:[#allocation5 + $0xe8] sm:$0xff]
    %v124 = vld [vmem:[#allocation5 + $0xf0] sm:$0xff]
    %v125 = vld [vmem:[#allocation5 + $0xf8] sm:$0xff]
    %v126 = vld [vmem:[#allocation7] sm:$0x3]
    %v128 = vperm.slane %v126, 0
    %v129 = vperm.slane %v126, 1
    %132 = vmatpush.msra.mxu0 %v124
    %133 = vmatpush.msra.mxu0 %v122
    %134 = vmatpush.msra.mxu0 %v120
    %135 = vmatpush.msra.mxu0 %v118
    %136 = vmatpush.msra.mxu0 %v116
    %137 = vmatpush.msra.mxu0 %v114
    %138 = vmatpush.msra.mxu0 %v112
    %139 = vmatpush.msra.mxu0 %v110
    %140 = vmatpush.msra.mxu0 %v108
    %141 = vmatpush.msra.mxu0 %v106
    %142 = vmatpush.msra.mxu0 %v104
    %143 = vmatpush.msra.mxu0 %v102
    %144 = vmatpush.msra.mxu0 %v100
    %145 = vmatpush.msra.mxu0 %v98
    %146 = vmatpush.msra.mxu0 %v96
    %147 = vmatpush.msra.mxu0 %v94
    %148 = vmatmul.f32.gmra.mxu0 %v93
    %v149 = vpop.f32.mrf.mxu0
    %v150 = vadd.f32 %v128, %v149
    %151 = vdwg.mxu0
    %152 = vmatpush.msra.mxu0 %v125
    %153 = vmatpush.msra.mxu0 %v123
    %154 = vmatpush.msra.mxu0 %v121
    %155 = vmatpush.msra.mxu0 %v119
    %156 = vmatpush.msra.mxu0 %v117
    %157 = vmatpush.msra.mxu0 %v115
    %158 = vmatpush.msra.mxu0 %v113
    %159 = vmatpush.msra.mxu0 %v111
    %160 = vmatpush.msra.mxu0 %v109
    %161 = vmatpush.msra.mxu0 %v107
    %162 = vmatpush.msra.mxu0 %v105
    %163 = vmatpush.msra.mxu0 %v103
    %164 = vmatpush.msra.mxu0 %v101
    %165 = vmatpush.msra.mxu0 %v99
    %166 = vmatpush.msra.mxu0 %v97
    %167 = vmatpush.msra.mxu0 %v95
    %168 = vmatmul.f32.gmra.mxu0 %v93
    %v169 = vpop.f32.mrf.mxu0
    %v170 = vadd.f32 %v129, %v169
    %171 = vdwg.mxu0
    %v172 = vmax.f32 %v150, 0.0
    %v173 = vmax.f32 %v170, 0.0
    %v174 = vld [vmem:[#allocation8] sm:$0xff]
    %v175 = vld [vmem:[#allocation8 + $0x8] sm:$0xff]
    %v176 = vld [vmem:[#allocation8 + $0x10] sm:$0xff]
    %v177 = vld [vmem:[#allocation8 + $0x18] sm:$0xff]
    %v178 = vld [vmem:[#allocation8 + $0x20] sm:$0xff]
    %v179 = vld [vmem:[#allocation8 + $0x28] sm:$0xff]
    %v180 = vld [vmem:[#allocation8 + $0x30] sm:$0xff]
    %v181 = vld [vmem:[#allocation8 + $0x38] sm:$0xff]
    %v182 = vld [vmem:[#allocation8 + $0x40] sm:$0xff]
    %v183 = vld [vmem:[#allocation8 + $0x48] sm:$0xff]
    %v184 = vld [vmem:[#allocation8 + $0x50] sm:$0xff]
    %v185 = vld [vmem:[#allocation8 + $0x58] sm:$0xff]
    %v186 = vld [vmem:[#allocation8 + $0x60] sm:$0xff]
    %v187 = vld [vmem:[#allocation8 + $0x68] sm:$0xff]
    %v188 = vld [vmem:[#allocation8 + $0x70] sm:$0xff]
    %v189 = vld [vmem:[#allocation8 + $0x78] sm:$0xff]
    %v190 = vld [vmem:[#allocation8 + $0x80] sm:$0xff]
    %v191 = vld [vmem:[#allocation8 + $0x88] sm:$0xff]
    %v192 = vld [vmem:[#allocation8 + $0x90] sm:$0xff]
    %v193 = vld [vmem:[#allocation8 + $0x98] sm:$0xff]
    %v194 = vld [vmem:[#allocation8 + $0xa0] sm:$0xff]
    %v195 = vld [vmem:[#allocation8 + $0xa8] sm:$0xff]
    %v196 = vld [vmem:[#allocation8 + $0xb0] sm:$0xff]
    %v197 = vld [vmem:[#allocation8 + $0xb8] sm:$0xff]
    %v198 = vld [vmem:[#allocation8 + $0xc0] sm:$0xff]
    %v199 = vld [vmem:[#allocation8 + $0xc8] sm:$0xff]
    %v200 = vld [vmem:[#allocation8 + $0xd0] sm:$0xff]
    %v201 = vld [vmem:[#allocation8 + $0xd8] sm:$0xff]
    %v202 = vld [vmem:[#allocation8 + $0xe0] sm:$0xff]
    %v203 = vld [vmem:[#allocation8 + $0xe8] sm:$0xff]
    %v204 = vld [vmem:[#allocation8 + $0xf0] sm:$0xff]
    %v205 = vld [vmem:[#allocation8 + $0xf8] sm:$0xff]
    %v206 = vld [vmem:[#allocation8 + $0x100] sm:$0xff]
    %v207 = vld [vmem:[#allocation8 + $0x108] sm:$0xff]
    %v208 = vld [vmem:[#allocation8 + $0x110] sm:$0xff]
    %v209 = vld [vmem:[#allocation8 + $0x118] sm:$0xff]
    %v210 = vld [vmem:[#allocation8 + $0x120] sm:$0xff]
    %v211 = vld [vmem:[#allocation8 + $0x128] sm:$0xff]
    %v212 = vld [vmem:[#allocation8 + $0x130] sm:$0xff]
    %v213 = vld [vmem:[#allocation8 + $0x138] sm:$0xff]
    %v214 = vld [vmem:[#allocation8 + $0x140] sm:$0xff]
    %v215 = vld [vmem:[#allocation8 + $0x148] sm:$0xff]
    %v216 = vld [vmem:[#allocation8 + $0x150] sm:$0xff]
    %v217 = vld [vmem:[#allocation8 + $0x158] sm:$0xff]
    %v218 = vld [vmem:[#allocation8 + $0x160] sm:$0xff]
    %v219 = vld [vmem:[#allocation8 + $0x168] sm:$0xff]
    %v220 = vld [vmem:[#allocation8 + $0x170] sm:$0xff]
    %v221 = vld [vmem:[#allocation8 + $0x178] sm:$0xff]
    %v222 = vld [vmem:[#allocation8 + $0x180] sm:$0xff]
    %v223 = vld [vmem:[#allocation8 + $0x188] sm:$0xff]
    %v224 = vld [vmem:[#allocation8 + $0x190] sm:$0xff]
    %v225 = vld [vmem:[#allocation8 + $0x198] sm:$0xff]
    %v226 = vld [vmem:[#allocation8 + $0x1a0] sm:$0xff]
    %v227 = vld [vmem:[#allocation8 + $0x1a8] sm:$0xff]
    %v228 = vld [vmem:[#allocation8 + $0x1b0] sm:$0xff]
    %v229 = vld [vmem:[#allocation8 + $0x1b8] sm:$0xff]
    %v230 = vld [vmem:[#allocation8 + $0x1c0] sm:$0xff]
    %v231 = vld [vmem:[#allocation8 + $0x1c8] sm:$0xff]
    %v232 = vld [vmem:[#allocation8 + $0x1d0] sm:$0xff]
    %v233 = vld [vmem:[#allocation8 + $0x1d8] sm:$0xff]
    %v234 = vld [vmem:[#allocation8 + $0x1e0] sm:$0xff]
    %v235 = vld [vmem:[#allocation8 + $0x1e8] sm:$0xff]
    %v236 = vld [vmem:[#allocation8 + $0x1f0] sm:$0xff]
    %v237 = vld [vmem:[#allocation8 + $0x1f8] sm:$0xff]
    %v238 = vld [vmem:[#allocation8 + $0x200] sm:$0xff]
    %v239 = vld [vmem:[#allocation8 + $0x208] sm:$0xff]
    %v240 = vld [vmem:[#allocation8 + $0x210] sm:$0xff]
    %v241 = vld [vmem:[#allocation8 + $0x218] sm:$0xff]
    %v242 = vld [vmem:[#allocation8 + $0x220] sm:$0xff]
    %v243 = vld [vmem:[#allocation8 + $0x228] sm:$0xff]
    %v244 = vld [vmem:[#allocation8 + $0x230] sm:$0xff]
    %v245 = vld [vmem:[#allocation8 + $0x238] sm:$0xff]
    %v246 = vld [vmem:[#allocation8 + $0x240] sm:$0xff]
    %v247 = vld [vmem:[#allocation8 + $0x248] sm:$0xff]
    %v248 = vld [vmem:[#allocation8 + $0x250] sm:$0xff]
    %v249 = vld [vmem:[#allocation8 + $0x258] sm:$0xff]
    %v250 = vld [vmem:[#allocation8 + $0x260] sm:$0xff]
    %v251 = vld [vmem:[#allocation8 + $0x268] sm:$0xff]
    %v252 = vld [vmem:[#allocation8 + $0x270] sm:$0xff]
    %v253 = vld [vmem:[#allocation8 + $0x278] sm:$0xff]
    %v254 = vld [vmem:[#allocation8 + $0x280] sm:$0xff]
    %v255 = vld [vmem:[#allocation8 + $0x288] sm:$0xff]
    %v256 = vld [vmem:[#allocation8 + $0x290] sm:$0xff]
    %v257 = vld [vmem:[#allocation8 + $0x298] sm:$0xff]
    %v258 = vld [vmem:[#allocation8 + $0x2a0] sm:$0xff]
    %v259 = vld [vmem:[#allocation8 + $0x2a8] sm:$0xff]
    %v260 = vld [vmem:[#allocation8 + $0x2b0] sm:$0xff]
    %v261 = vld [vmem:[#allocation8 + $0x2b8] sm:$0xff]
    %v262 = vld [vmem:[#allocation8 + $0x2c0] sm:$0xff]
    %v263 = vld [vmem:[#allocation8 + $0x2c8] sm:$0xff]
    %v264 = vld [vmem:[#allocation8 + $0x2d0] sm:$0xff]
    %v265 = vld [vmem:[#allocation8 + $0x2d8] sm:$0xff]
    %v266 = vld [vmem:[#allocation8 + $0x2e0] sm:$0xff]
    %v267 = vld [vmem:[#allocation8 + $0x2e8] sm:$0xff]
    %v268 = vld [vmem:[#allocation8 + $0x2f0] sm:$0xff]
    %v269 = vld [vmem:[#allocation8 + $0x2f8] sm:$0xff]
    %v270 = vld [vmem:[#allocation8 + $0x300] sm:$0xff]
    %v271 = vld [vmem:[#allocation8 + $0x308] sm:$0xff]
    %v272 = vld [vmem:[#allocation8 + $0x310] sm:$0xff]
    %v273 = vld [vmem:[#allocation8 + $0x318] sm:$0xff]
    %v274 = vld [vmem:[#allocation8 + $0x320] sm:$0xff]
    %v275 = vld [vmem:[#allocation8 + $0x328] sm:$0xff]
    %v276 = vld [vmem:[#allocation8 + $0x330] sm:$0xff]
    %v277 = vld [vmem:[#allocation8 + $0x338] sm:$0xff]
    %v278 = vld [vmem:[#allocation8 + $0x340] sm:$0xff]
    %v279 = vld [vmem:[#allocation8 + $0x348] sm:$0xff]
    %v280 = vld [vmem:[#allocation8 + $0x350] sm:$0xff]
    %v281 = vld [vmem:[#allocation8 + $0x358] sm:$0xff]
    %v282 = vld [vmem:[#allocation8 + $0x360] sm:$0xff]
    %v283 = vld [vmem:[#allocation8 + $0x368] sm:$0xff]
    %v284 = vld [vmem:[#allocation8 + $0x370] sm:$0xff]
    %v285 = vld [vmem:[#allocation8 + $0x378] sm:$0xff]
    %v286 = vld [vmem:[#allocation8 + $0x380] sm:$0xff]
    %v287 = vld [vmem:[#allocation8 + $0x388] sm:$0xff]
    %v288 = vld [vmem:[#allocation8 + $0x390] sm:$0xff]
    %v289 = vld [vmem:[#allocation8 + $0x398] sm:$0xff]
    %v290 = vld [vmem:[#allocation8 + $0x3a0] sm:$0xff]
    %v291 = vld [vmem:[#allocation8 + $0x3a8] sm:$0xff]
    %v292 = vld [vmem:[#allocation8 + $0x3b0] sm:$0xff]
    %v293 = vld [vmem:[#allocation8 + $0x3b8] sm:$0xff]
    %v294 = vld [vmem:[#allocation8 + $0x3c0] sm:$0xff]
    %v295 = vld [vmem:[#allocation8 + $0x3c8] sm:$0xff]
    %v296 = vld [vmem:[#allocation8 + $0x3d0] sm:$0xff]
    %v297 = vld [vmem:[#allocation8 + $0x3d8] sm:$0xff]
    %v298 = vld [vmem:[#allocation8 + $0x3e0] sm:$0xff]
    %v299 = vld [vmem:[#allocation8 + $0x3e8] sm:$0xff]
    %v300 = vld [vmem:[#allocation8 + $0x3f0] sm:$0xff]
    %v301 = vld [vmem:[#allocation8 + $0x3f8] sm:$0xff]
    %v302 = vld [vmem:[#allocation10] sm:$0xf]
    %v304 = vperm.slane %v302, 0
    %v305 = vperm.slane %v302, 1
    %v306 = vperm.slane %v302, 2
    %v307 = vperm.slane %v302, 3
    %312 = vmatpush.msra.mxu0 %v234
    %313 = vmatpush.msra.mxu0 %v230
    %314 = vmatpush.msra.mxu0 %v226
    %315 = vmatpush.msra.mxu0 %v222
    %316 = vmatpush.msra.mxu0 %v218
    %317 = vmatpush.msra.mxu0 %v214
    %318 = vmatpush.msra.mxu0 %v210
    %319 = vmatpush.msra.mxu0 %v206
    %320 = vmatpush.msra.mxu0 %v202
    %321 = vmatpush.msra.mxu0 %v198
    %322 = vmatpush.msra.mxu0 %v194
    %323 = vmatpush.msra.mxu0 %v190
    %324 = vmatpush.msra.mxu0 %v186
    %325 = vmatpush.msra.mxu0 %v182
    %326 = vmatpush.msra.mxu0 %v178
    %327 = vmatpush.msra.mxu0 %v174
    %328 = vmatmul.f32.gmra.mxu0 %v172
    %v329 = vpop.f32.mrf.mxu0
    %v330 = vadd.f32 %v304, %v329
    %331 = vdwg.mxu0
    %332 = vmatpush.msra.mxu0 %v298
    %333 = vmatpush.msra.mxu0 %v294
    %334 = vmatpush.msra.mxu0 %v290
    %335 = vmatpush.msra.mxu0 %v286
    %336 = vmatpush.msra.mxu0 %v282
    %337 = vmatpush.msra.mxu0 %v278
    %338 = vmatpush.msra.mxu0 %v274
    %339 = vmatpush.msra.mxu0 %v270
    %340 = vmatpush.msra.mxu0 %v266
    %341 = vmatpush.msra.mxu0 %v262
    %342 = vmatpush.msra.mxu0 %v258
    %343 = vmatpush.msra.mxu0 %v254
    %344 = vmatpush.msra.mxu0 %v250
    %345 = vmatpush.msra.mxu0 %v246
    %346 = vmatpush.msra.mxu0 %v242
    %347 = vmatpush.msra.mxu0 %v238
    %348 = vmatmul.f32.gmra.mxu0 %v173
    %v349 = vpop.f32.mrf.mxu0
    %v350 = vadd.f32 %v330, %v349
    %351 = vdwg.mxu0
    %352 = vmatpush.msra.mxu0 %v235
    %353 = vmatpush.msra.mxu0 %v231
    %354 = vmatpush.msra.mxu0 %v227
    %355 = vmatpush.msra.mxu0 %v223
    %356 = vmatpush.msra.mxu0 %v219
    %357 = vmatpush.msra.mxu0 %v215
    %358 = vmatpush.msra.mxu0 %v211
    %359 = vmatpush.msra.mxu0 %v207
    %360 = vmatpush.msra.mxu0 %v203
    %361 = vmatpush.msra.mxu0 %v199
    %362 = vmatpush.msra.mxu0 %v195
    %363 = vmatpush.msra.mxu0 %v191
    %364 = vmatpush.msra.mxu0 %v187
    %365 = vmatpush.msra.mxu0 %v183
    %366 = vmatpush.msra.mxu0 %v179
    %367 = vmatpush.msra.mxu0 %v175
    %368 = vmatmul.f32.gmra.mxu0 %v172
    %v369 = vpop.f32.mrf.mxu0
    %v370 = vadd.f32 %v305, %v369
    %371 = vdwg.mxu0
    %372 = vmatpush.msra.mxu0 %v299
    %373 = vmatpush.msra.mxu0 %v295
    %374 = vmatpush.msra.mxu0 %v291
    %375 = vmatpush.msra.mxu0 %v287
    %376 = vmatpush.msra.mxu0 %v283
    %377 = vmatpush.msra.mxu0 %v279
    %378 = vmatpush.msra.mxu0 %v275
    %379 = vmatpush.msra.mxu0 %v271
    %380 = vmatpush.msra.mxu0 %v267
    %381 = vmatpush.msra.mxu0 %v263
    %382 = vmatpush.msra.mxu0 %v259
    %383 = vmatpush.msra.mxu0 %v255
    %384 = vmatpush.msra.mxu0 %v251
    %385 = vmatpush.msra.mxu0 %v247
    %386 = vmatpush.msra.mxu0 %v243
    %387 = vmatpush.msra.mxu0 %v239
    %388 = vmatmul.f32.gmra.mxu0 %v173
    %v389 = vpop.f32.mrf.mxu0
    %v390 = vadd.f32 %v370, %v389
    %391 = vdwg.mxu0
    %392 = vmatpush.msra.mxu0 %v236
    %393 = vmatpush.msra.mxu0 %v232
    %394 = vmatpush.msra.mxu0 %v228
    %395 = vmatpush.msra.mxu0 %v224
    %396 = vmatpush.msra.mxu0 %v220
    %397 = vmatpush.msra.mxu0 %v216
    %398 = vmatpush.msra.mxu0 %v212
    %399 = vmatpush.msra.mxu0 %v208
    %400 = vmatpush.msra.mxu0 %v204
    %401 = vmatpush.msra.mxu0 %v200
    %402 = vmatpush.msra.mxu0 %v196
    %403 = vmatpush.msra.mxu0 %v192
    %404 = vmatpush.msra.mxu0 %v188
    %405 = vmatpush.msra.mxu0 %v184
    %406 = vmatpush.msra.mxu0 %v180
    %407 = vmatpush.msra.mxu0 %v176
    %408 = vmatmul.f32.gmra.mxu0 %v172
    %v409 = vpop.f32.mrf.mxu0
    %v410 = vadd.f32 %v306, %v409
    %411 = vdwg.mxu0
    %412 = vmatpush.msra.mxu0 %v300
    %413 = vmatpush.msra.mxu0 %v296
    %414 = vmatpush.msra.mxu0 %v292
    %415 = vmatpush.msra.mxu0 %v288
    %416 = vmatpush.msra.mxu0 %v284
    %417 = vmatpush.msra.mxu0 %v280
    %418 = vmatpush.msra.mxu0 %v276
    %419 = vmatpush.msra.mxu0 %v272
    %420 = vmatpush.msra.mxu0 %v268
    %421 = vmatpush.msra.mxu0 %v264
    %422 = vmatpush.msra.mxu0 %v260
    %423 = vmatpush.msra.mxu0 %v256
    %424 = vmatpush.msra.mxu0 %v252
    %425 = vmatpush.msra.mxu0 %v248
    %426 = vmatpush.msra.mxu0 %v244
    %427 = vmatpush.msra.mxu0 %v240
    %428 = vmatmul.f32.gmra.mxu0 %v173
    %v429 = vpop.f32.mrf.mxu0
    %v430 = vadd.f32 %v410, %v429
    %431 = vdwg.mxu0
    %432 = vmatpush.msra.mxu0 %v237
    %433 = vmatpush.msra.mxu0 %v233
    %434 = vmatpush.msra.mxu0 %v229
    %435 = vmatpush.msra.mxu0 %v225
    %436 = vmatpush.msra.mxu0 %v221
    %437 = vmatpush.msra.mxu0 %v217
    %438 = vmatpush.msra.mxu0 %v213
    %439 = vmatpush.msra.mxu0 %v209
    %440 = vmatpush.msra.mxu0 %v205
    %441 = vmatpush.msra.mxu0 %v201
    %442 = vmatpush.msra.mxu0 %v197
    %443 = vmatpush.msra.mxu0 %v193
    %444 = vmatpush.msra.mxu0 %v189
    %445 = vmatpush.msra.mxu0 %v185
    %446 = vmatpush.msra.mxu0 %v181
    %447 = vmatpush.msra.mxu0 %v177
    %448 = vmatmul.f32.gmra.mxu0 %v172
    %v449 = vpop.f32.mrf.mxu0
    %v450 = vadd.f32 %v307, %v449
    %451 = vdwg.mxu0
    %452 = vmatpush.msra.mxu0 %v301
    %453 = vmatpush.msra.mxu0 %v297
    %454 = vmatpush.msra.mxu0 %v293
    %455 = vmatpush.msra.mxu0 %v289
    %456 = vmatpush.msra.mxu0 %v285
    %457 = vmatpush.msra.mxu0 %v281
    %458 = vmatpush.msra.mxu0 %v277
    %459 = vmatpush.msra.mxu0 %v273
    %460 = vmatpush.msra.mxu0 %v269
    %461 = vmatpush.msra.mxu0 %v265
    %462 = vmatpush.msra.mxu0 %v261
    %463 = vmatpush.msra.mxu0 %v257
    %464 = vmatpush.msra.mxu0 %v253
    %465 = vmatpush.msra.mxu0 %v249
    %466 = vmatpush.msra.mxu0 %v245
    %467 = vmatpush.msra.mxu0 %v241
    %468 = vmatmul.f32.gmra.mxu0 %v173
    %v469 = vpop.f32.mrf.mxu0
    %v470 = vadd.f32 %v450, %v469
    %471 = vdwg.mxu0
    %v472 = vxor.u32 %v350, 2147483648
    %v473 = vxor.u32 %v390, 2147483648
    %v474 = vxor.u32 %v430, 2147483648
    %v475 = vxor.u32 %v470, 2147483648
    %v476 = vmul.f32 %v472, 1.442695
    %v477 = vpow.pop %v476
    %v478 = vmul.f32 %v473, 1.442695
    %v479 = vpow.pop %v478
    %v480 = vmul.f32 %v474, 1.442695
    %v481 = vpow.pop %v480
    %v482 = vmul.f32 %v475, 1.442695
    %v483 = vpow.pop %v482
    %v484 = vadd.f32 %v477, 1.0
    %v485 = vadd.f32 %v479, 1.0
    %v486 = vadd.f32 %v481, 1.0
    %v487 = vadd.f32 %v483, 1.0
    %v488 = vrcp.pop %v484
    %v489 = vmul.f32 %v484, %v488
    %v490 = vsub.f32 1.0, %v489
    %v491 = vmul.f32 %v488, %v490
    %v492 = vadd.f32 %v488, %v491
    %vm493 = vweird.f32 %v484
    %vm494 = vweird.f32 %v488
    %vm495 = vmor %vm493, %vm494
    %v496 = vsel %vm495, %v488, %v492
    %v497 = vand.u32 2147483647, %v484
    %vm498 = vcmp.eq.f32.partialorder %v497, 8.507059e+37
    %v499 = vand.u32 %v484, 2147483648
    %v500 = vor.u32 1.1754944e-38, %v499
    %v501 = vsel %vm498, %v500, %v496
    %v502 = vmul.f32 1.0, %v501
    %v503 = vrcp.pop %v485
    %v504 = vmul.f32 %v485, %v503
    %v505 = vsub.f32 1.0, %v504
    %v506 = vmul.f32 %v503, %v505
    %v507 = vadd.f32 %v503, %v506
    %vm508 = vweird.f32 %v485
    %vm509 = vweird.f32 %v503
    %vm510 = vmor %vm508, %vm509
    %v511 = vsel %vm510, %v503, %v507
    %v512 = vand.u32 2147483647, %v485
    %vm513 = vcmp.eq.f32.partialorder %v512, 8.507059e+37
    %v514 = vand.u32 %v485, 2147483648
    %v515 = vor.u32 1.1754944e-38, %v514
    %v516 = vsel %vm513, %v515, %v511
    %v517 = vmul.f32 1.0, %v516
    %v518 = vrcp.pop %v486
    %v519 = vmul.f32 %v486, %v518
    %v520 = vsub.f32 1.0, %v519
    %v521 = vmul.f32 %v518, %v520
    %v522 = vadd.f32 %v518, %v521
    %vm523 = vweird.f32 %v486
    %vm524 = vweird.f32 %v518
    %vm525 = vmor %vm523, %vm524
    %v526 = vsel %vm525, %v518, %v522
    %v527 = vand.u32 2147483647, %v486
    %vm528 = vcmp.eq.f32.partialorder %v527, 8.507059e+37
    %v529 = vand.u32 %v486, 2147483648
    %v530 = vor.u32 1.1754944e-38, %v529
    %v531 = vsel %vm528, %v530, %v526
    %v532 = vmul.f32 1.0, %v531
    %v533 = vrcp.pop %v487
    %v534 = vmul.f32 %v487, %v533
    %v535 = vsub.f32 1.0, %v534
    %v536 = vmul.f32 %v533, %v535
    %v537 = vadd.f32 %v533, %v536
    %vm538 = vweird.f32 %v487
    %vm539 = vweird.f32 %v533
    %vm540 = vmor %vm538, %vm539
    %v541 = vsel %vm540, %v533, %v537
    %v542 = vand.u32 2147483647, %v487
    %vm543 = vcmp.eq.f32.partialorder %v542, 8.507059e+37
    %v544 = vand.u32 %v487, 2147483648
    %v545 = vor.u32 1.1754944e-38, %v544
    %v546 = vsel %vm543, %v545, %v541
    %v547 = vmul.f32 1.0, %v546
    %548 = vst [vmem:[#allocation11] sm:$0xff] %v502
    %549 = vst [vmem:[#allocation11 + $0x8] sm:$0xff] %v517
    %550 = vst [vmem:[#allocation11 + $0x10] sm:$0xff] %v532
    %551 = vst [vmem:[#allocation11 + $0x18] sm:$0xff] %v547
    // Predicated region
    $region42: #{tpu_custom_call.1} parent=1 // pred_check
      _
    $region43: #{tpu_custom_call.1} parent=1 // pred_check_branch
      %553 = sbr.rel (0) target = $region45
    $region44: #{tpu_custom_call.1} parent=1 // pred_region
      %555 = vsyncadd [#allocation4], 0
      %s557 = sshll.u32 [#allocation11], 4
      %s558 = int_to_ptr.vmem [resolvable:$true] %s557
      %s559 = sshll.u32 %s5, 4
      %s560 = int_to_ptr.hbm [resolvable:$true] %s559
      %562 = dma.vmem_to_hbm [thread:$0]  %s558, 512, %s560, [#allocation4]
    $region45: #{tpu_custom_call.1} parent=1 // pred_fallthru
      _
    // Predicated region
    $region46: #{tpu_custom_call.1} parent=1 // pred_check
      _
    $region47: #{tpu_custom_call.1} parent=1 // pred_check_branch
      %564 = sbr.rel (0) target = $region49
    $region48: #{tpu_custom_call.1} parent=1 // pred_region
      %566 = dma.done [#allocation4], 512
    $region49: #{tpu_custom_call.1} parent=1 // pred_fallthru
      _
    %567 = vsyncpa [#allocation3], 1
    %568 = vsyncpa [#allocation6], 1
    %569 = vsyncpa [#allocation9], 1
    %570 = vsyncpa [#allocation4], 1

</llo_original>
